<compile_context>
chip_gen: v6e
topology: v6e:2x2x1
jax: 0.10.0
libtpu: 0.0.40
codegen_flags: <defaults>
</compile_context>

<pallas_src>
import functools

import jax
import jax.numpy as jnp
from jax import lax
from jax.experimental import pallas as pl
from jax.experimental.pallas import tpu as pltpu


def patch_expand_kernel(eps, x_ref, w_ref, gsum_ref, gbrd_ref,
                        gamma_ref, beta_ref, o_ref):
    _, block_h, W, C = x_ref.shape
    C2 = w_ref.shape[1]              # 2 * C
    cout = C2 // 4                   # C // 2 channels per output sub-pixel
    m = block_h * W

    # (1, block_h, W, C) -> (m, C): leading-dim merge only (lane dim untouched).
    x2d = x_ref[...].reshape(m, C)

    # Linear(dim -> 2*dim, bias=False): one MXU matmul, f32 accumulation.
    y = jnp.dot(x2d, w_ref[...], preferred_element_type=jnp.float32)   # (m, 2C)

    # Grouped LayerNorm over each of the 4 sub-pixel groups of `cout` channels.
    # Group statistics via tiny matmuls with a group-indicator matrix: keeps
    # everything 2-D / relayout-free; rsqrt runs on (m, 4) only (EUP slot).
    inv_cout = 1.0 / float(cout)
    mean_g = jnp.dot(y, gsum_ref[...],
                     preferred_element_type=jnp.float32) * inv_cout     # (m, 4)
    mean_f = jnp.dot(mean_g, gbrd_ref[...],
                     preferred_element_type=jnp.float32)                # (m, 2C)
    cen = y - mean_f
    var_g = jnp.dot(cen * cen, gsum_ref[...],
                    preferred_element_type=jnp.float32) * inv_cout      # (m, 4)
    rstd_f = jnp.dot(lax.rsqrt(var_g + eps), gbrd_ref[...],
                     preferred_element_type=jnp.float32)                # (m, 2C)
    normed = cen * rstd_f * gamma_ref[...] + beta_ref[...]              # (m, 2C)

    # (m, 2C) -> (1, block_h, W, 2C): leading-dim split only, lane-dense store.
    o_ref[...] = normed.reshape(1, block_h, W, C2).astype(o_ref.dtype)


def _pick_block_h(H, W):
    """Largest row-band (<= ~256 matmul rows per grid step) that divides H."""
    target = max(1, min(H, 256 // max(W, 1)))
    for th in range(target, 0, -1):
        if H % th == 0:
            return th
    return H


def patch_expand_forward(x_nchw, weight, gamma, beta, *, eps=1e-5, block_h=None):
    """PatchExpand forward.

    x_nchw: (B, C, H, W); weight: (2C, C) (torch nn.Linear layout);
    gamma/beta: (C//2,) LayerNorm affine.  Returns (B, C//2, 2H, 2W).
    """
    B, C, H, W = x_nchw.shape
    assert C % 2 == 0, "dim must be even (LayerNorm over dim // 2)"
    assert weight.shape == (2 * C, C)
    cout = C // 2
    C2 = 2 * C

    if block_h is None:
        block_h = _pick_block_h(H, W)
    assert H % block_h == 0
    grid = (B, H // block_h)

    # The module itself starts with x.permute(0, 2, 3, 1); same single op here.
    x_nhwc = jnp.transpose(x_nchw, (0, 2, 3, 1)).astype(jnp.float32)

    # Kernel-friendly parameter layouts (host side, one-time).
    w_k = jnp.transpose(weight).astype(jnp.float32)                  # (C, 2C)
    gamma_k = jnp.tile(gamma.astype(jnp.float32), 4).reshape(1, C2)  # per-group
    beta_k = jnp.tile(beta.astype(jnp.float32), 4).reshape(1, C2)
    ch = jnp.arange(C2, dtype=jnp.int32)
    gsum = (ch[:, None] // cout ==
            jnp.arange(4, dtype=jnp.int32)[None, :]).astype(jnp.float32)  # (2C, 4)
    gbrd = jnp.transpose(gsum)                                            # (4, 2C)

    kern = functools.partial(patch_expand_kernel, float(eps))

    # VMEM budget sized to the chosen tiles (double-buffered activations + params).
    blk_bytes = 4 * block_h * W * (C + C2)
    param_bytes = 4 * (C * C2 + 2 * C2 * 4 + 2 * C2)
    vmem_limit = int(min(100 * 2**20,
                         max(16 * 2**20, 4 * blk_bytes + 2 * param_bytes + (1 << 20))))

    tokens = B * H * W
    cost = pl.CostEstimate(
        flops=2 * tokens * C * C2 + 6 * tokens * C2 * 4 + 8 * tokens * C2,
        transcendentals=4 * tokens,
        bytes_accessed=4 * (tokens * C + tokens * C2 + C * C2 + 3 * C2 * 4),
    )

    out_tok = pl.pallas_call(
        kern,
        out_shape=jax.ShapeDtypeStruct((B, H, W, C2), jnp.float32),
        grid=grid,
        in_specs=[
            pl.BlockSpec((1, block_h, W, C), lambda b, h: (b, h, 0, 0)),  # x tile
            pl.BlockSpec((C, C2), lambda b, h: (0, 0)),                   # weight
            pl.BlockSpec((C2, 4), lambda b, h: (0, 0)),                   # group sum
            pl.BlockSpec((4, C2), lambda b, h: (0, 0)),                   # group bcast
            pl.BlockSpec((1, C2), lambda b, h: (0, 0)),                   # gamma
            pl.BlockSpec((1, C2), lambda b, h: (0, 0)),                   # beta
        ],
        out_specs=pl.BlockSpec((1, block_h, W, C2), lambda b, h: (b, h, 0, 0)),
        compiler_params=pltpu.CompilerParams(
            dimension_semantics=("parallel", "parallel"),
            vmem_limit_bytes=vmem_limit),
        cost_estimate=cost,
    )(x_nhwc, w_k, gsum, gbrd, gamma_k, beta_k)

    # rearrange 'b h w (p1 p2 c) -> b (h p1) (w p2) c' fused with the final
    # channels-first permute: a single XLA transpose (the module needs a full
    # output permute anyway, so the pixel shuffle is free here).
    out = out_tok.reshape(B, H, W, 2, 2, cout)
    out = jnp.transpose(out, (0, 5, 1, 3, 2, 4)).reshape(B, cout, 2 * H, 2 * W)
    return out


def reference_forward(x_nchw, weight, gamma, beta, eps=1e-5):
    """Pure-JAX reference following the PyTorch module op-by-op."""
    B, C, H, W = x_nchw.shape
    cout = C // 2
    x = jnp.transpose(x_nchw, (0, 2, 3, 1)).reshape(B, H * W, C).astype(jnp.float32)
    y = jnp.dot(x, jnp.transpose(weight).astype(jnp.float32))           # (B, HW, 2C)
    y = y.reshape(B, H, W, 2, 2, cout)
    y = jnp.transpose(y, (0, 1, 3, 2, 4, 5)).reshape(B, 2 * H, 2 * W, cout)
    mean = jnp.mean(y, axis=-1, keepdims=True)
    var = jnp.mean(jnp.square(y - mean), axis=-1, keepdims=True)
    y = (y - mean) / jnp.sqrt(var + eps) * gamma + beta
    return jnp.transpose(y, (0, 3, 1, 2))


def make_params(key, dim):
    k_w, k_g, k_b = jax.random.split(key, 3)
    bound = 1.0 / (dim ** 0.5)
    weight = jax.random.uniform(k_w, (2 * dim, dim), jnp.float32, -bound, bound)
    gamma = 1.0 + 0.1 * jax.random.normal(k_g, (dim // 2,), jnp.float32)
    beta = 0.1 * jax.random.normal(k_b, (dim // 2,), jnp.float32)
    return weight, gamma, beta


if __name__ == "__main__":
    # Small shapes consistent with the module (dim_scale=2):
    # x: (B, dim, H, W) = (2, 32, 16, 16)  ->  out: (2, 16, 32, 32)
    B, dim, H, W = 2, 32, 16, 16
    key = jax.random.PRNGKey(0)
    kx, kp = jax.random.split(key)
    x = jax.random.normal(kx, (B, dim, H, W), jnp.float32)
    weight, gamma, beta = make_params(kp, dim)

    out = patch_expand_forward(x, weight, gamma, beta)
    out = jax.block_until_ready(out)

    ref = reference_forward(x, weight, gamma, beta)
    assert out.shape == (B, dim // 2, 2 * H, 2 * W)
    max_err = float(jnp.max(jnp.abs(out - ref)))
    assert jnp.allclose(out, ref, atol=1e-3, rtol=1e-3), f"max err {max_err}"
    print("KERNEL_OK")
</pallas_src>

<mosaic_0001>
module attributes {stable_mosaic.version = 11 : i64} {
  func.func @patch_expand_kernel(%arg0: i32, %arg1: i32, %arg2: memref<1x16x16x32xf32, #tpu.memory_space<vmem>>, %arg3: memref<32x64xf32, #tpu.memory_space<vmem>>, %arg4: memref<64x4xf32, #tpu.memory_space<vmem>>, %arg5: memref<4x64xf32, #tpu.memory_space<vmem>>, %arg6: memref<1x64xf32, #tpu.memory_space<vmem>>, %arg7: memref<1x64xf32, #tpu.memory_space<vmem>>, %arg8: memref<1x16x16x64xf32, #tpu.memory_space<vmem>>) attributes {dimension_semantics = [#tpu.dimension_semantics<parallel>, #tpu.dimension_semantics<parallel>], iteration_bounds = array<i64: 2, 1>, scalar_prefetch = 0 : i64, scratch_operands = 0 : i64, tpu.core_type = #tpu.core_type<tc>, window_params = [{transform_indices = @transform_0, window_bounds = array<i64: 1, 16, 16, 32>}, {pipeline_mode = #tpu.pipeline_mode<synchronous>, transform_indices = @transform_1, window_bounds = array<i64: 32, 64>}, {pipeline_mode = #tpu.pipeline_mode<synchronous>, transform_indices = @transform_2, window_bounds = array<i64: 64, 4>}, {pipeline_mode = #tpu.pipeline_mode<synchronous>, transform_indices = @transform_3, window_bounds = array<i64: 4, 64>}, {pipeline_mode = #tpu.pipeline_mode<synchronous>, transform_indices = @transform_4, window_bounds = array<i64: 1, 64>}, {pipeline_mode = #tpu.pipeline_mode<synchronous>, transform_indices = @transform_5, window_bounds = array<i64: 1, 64>}, {transform_indices = @transform_6, window_bounds = array<i64: 1, 16, 16, 64>}]} {
    %c0 = arith.constant 0 : index
    %c0_0 = arith.constant 0 : index
    %c0_1 = arith.constant 0 : index
    %c0_2 = arith.constant 0 : index
    %0 = vector.load %arg2[%c0, %c0_0, %c0_1, %c0_2] : memref<1x16x16x32xf32, #tpu.memory_space<vmem>>, vector<1x16x16x32xf32>
    %1 = vector.shape_cast %0 : vector<1x16x16x32xf32> to vector<256x32xf32>
    %c0_3 = arith.constant 0 : index
    %c0_4 = arith.constant 0 : index
    %2 = vector.load %arg3[%c0_3, %c0_4] : memref<32x64xf32, #tpu.memory_space<vmem>>, vector<32x64xf32>
    %cst = arith.constant dense<0.000000e+00> : vector<256x64xf32>
    %3 = tpu.matmul %1, %2, %cst {dimension_numbers = #tpu.dot_dimension_numbers<[1], [0], [0], [1], [0, 0, 1, 1], [], []>} : vector<256x32xf32>, vector<32x64xf32>, vector<256x64xf32> -> vector<256x64xf32>
    %c0_5 = arith.constant 0 : index
    %c0_6 = arith.constant 0 : index
    %4 = vector.load %arg4[%c0_5, %c0_6] : memref<64x4xf32, #tpu.memory_space<vmem>>, vector<64x4xf32>
    %cst_7 = arith.constant dense<0.000000e+00> : vector<256x4xf32>
    %5 = tpu.matmul %3, %4, %cst_7 {dimension_numbers = #tpu.dot_dimension_numbers<[1], [0], [0], [1], [0, 0, 1, 1], [], []>} : vector<256x64xf32>, vector<64x4xf32>, vector<256x4xf32> -> vector<256x4xf32>
    %cst_8 = arith.constant 6.250000e-02 : f32
    %6 = vector.broadcast %cst_8 : f32 to vector<256x4xf32>
    %7 = arith.mulf %5, %6 : vector<256x4xf32>
    %c0_9 = arith.constant 0 : index
    %c0_10 = arith.constant 0 : index
    %8 = vector.load %arg5[%c0_9, %c0_10] : memref<4x64xf32, #tpu.memory_space<vmem>>, vector<4x64xf32>
    %cst_11 = arith.constant dense<0.000000e+00> : vector<256x64xf32>
    %9 = tpu.matmul %7, %8, %cst_11 {dimension_numbers = #tpu.dot_dimension_numbers<[1], [0], [0], [1], [0, 0, 1, 1], [], []>} : vector<256x4xf32>, vector<4x64xf32>, vector<256x64xf32> -> vector<256x64xf32>
    %10 = arith.subf %3, %9 : vector<256x64xf32>
    %11 = arith.mulf %10, %10 : vector<256x64xf32>
    %c0_12 = arith.constant 0 : index
    %c0_13 = arith.constant 0 : index
    %12 = vector.load %arg4[%c0_12, %c0_13] : memref<64x4xf32, #tpu.memory_space<vmem>>, vector<64x4xf32>
    %cst_14 = arith.constant dense<0.000000e+00> : vector<256x4xf32>
    %13 = tpu.matmul %11, %12, %cst_14 {dimension_numbers = #tpu.dot_dimension_numbers<[1], [0], [0], [1], [0, 0, 1, 1], [], []>} : vector<256x64xf32>, vector<64x4xf32>, vector<256x4xf32> -> vector<256x4xf32>
    %cst_15 = arith.constant 6.250000e-02 : f32
    %14 = vector.broadcast %cst_15 : f32 to vector<256x4xf32>
    %15 = arith.mulf %13, %14 : vector<256x4xf32>
    %cst_16 = arith.constant 9.99999974E-6 : f32
    %16 = vector.broadcast %cst_16 : f32 to vector<256x4xf32>
    %17 = arith.addf %15, %16 : vector<256x4xf32>
    %18 = math.rsqrt %17 : vector<256x4xf32>
    %c0_17 = arith.constant 0 : index
    %c0_18 = arith.constant 0 : index
    %19 = vector.load %arg5[%c0_17, %c0_18] : memref<4x64xf32, #tpu.memory_space<vmem>>, vector<4x64xf32>
    %cst_19 = arith.constant dense<0.000000e+00> : vector<256x64xf32>
    %20 = tpu.matmul %18, %19, %cst_19 {dimension_numbers = #tpu.dot_dimension_numbers<[1], [0], [0], [1], [0, 0, 1, 1], [], []>} : vector<256x4xf32>, vector<4x64xf32>, vector<256x64xf32> -> vector<256x64xf32>
    %21 = arith.mulf %10, %20 : vector<256x64xf32>
    %c0_20 = arith.constant 0 : index
    %c0_21 = arith.constant 0 : index
    %22 = vector.load %arg6[%c0_20, %c0_21] : memref<1x64xf32, #tpu.memory_space<vmem>>, vector<1x64xf32>
    %23 = vector.broadcast %22 : vector<1x64xf32> to vector<256x64xf32>
    %24 = arith.mulf %21, %23 : vector<256x64xf32>
    %c0_22 = arith.constant 0 : index
    %c0_23 = arith.constant 0 : index
    %25 = vector.load %arg7[%c0_22, %c0_23] : memref<1x64xf32, #tpu.memory_space<vmem>>, vector<1x64xf32>
    %26 = vector.broadcast %25 : vector<1x64xf32> to vector<256x64xf32>
    %27 = arith.addf %24, %26 : vector<256x64xf32>
    %28 = vector.shape_cast %27 : vector<256x64xf32> to vector<1x16x16x64xf32>
    %c0_24 = arith.constant 0 : index
    %c0_25 = arith.constant 0 : index
    %c0_26 = arith.constant 0 : index
    %c0_27 = arith.constant 0 : index
    %29 = vector.load %arg8[%c0_24, %c0_25, %c0_26, %c0_27] : memref<1x16x16x64xf32, #tpu.memory_space<vmem>>, vector<1x16x16x64xf32>
    tpu.vector_store %arg8[%c0_24, %c0_25, %c0_26, %c0_27], %28 {strides = array<i32>} : memref<1x16x16x64xf32, #tpu.memory_space<vmem>>, vector<1x16x16x64xf32>,
    return
  }
  func.func @transform_0(%arg0: i32, %arg1: i32) -> (i32, i32, i32, i32) {
    %c0_i32 = arith.constant 0 : i32
    %c0_i32_0 = arith.constant 0 : i32
    %c0_i32_1 = arith.constant 0 : i32
    return %arg0, %arg1, %c0_i32, %c0_i32_0 : i32, i32, i32, i32
  }
  func.func @transform_1(%arg0: i32, %arg1: i32) -> (i32, i32) {
    %c0_i32 = arith.constant 0 : i32
    %c0_i32_0 = arith.constant 0 : i32
    %c0_i32_1 = arith.constant 0 : i32
    return %c0_i32, %c0_i32_0 : i32, i32
  }
  func.func @transform_2(%arg0: i32, %arg1: i32) -> (i32, i32) {
    %c0_i32 = arith.constant 0 : i32
    %c0_i32_0 = arith.constant 0 : i32
    %c0_i32_1 = arith.constant 0 : i32
    return %c0_i32, %c0_i32_0 : i32, i32
  }
  func.func @transform_3(%arg0: i32, %arg1: i32) -> (i32, i32) {
    %c0_i32 = arith.constant 0 : i32
    %c0_i32_0 = arith.constant 0 : i32
    %c0_i32_1 = arith.constant 0 : i32
    return %c0_i32, %c0_i32_0 : i32, i32
  }
  func.func @transform_4(%arg0: i32, %arg1: i32) -> (i32, i32) {
    %c0_i32 = arith.constant 0 : i32
    %c0_i32_0 = arith.constant 0 : i32
    %c0_i32_1 = arith.constant 0 : i32
    return %c0_i32, %c0_i32_0 : i32, i32
  }
  func.func @transform_5(%arg0: i32, %arg1: i32) -> (i32, i32) {
    %c0_i32 = arith.constant 0 : i32
    %c0_i32_0 = arith.constant 0 : i32
    %c0_i32_1 = arith.constant 0 : i32
    return %c0_i32, %c0_i32_0 : i32, i32
  }
  func.func @transform_6(%arg0: i32, %arg1: i32) -> (i32, i32, i32, i32) {
    %c0_i32 = arith.constant 0 : i32
    %c0_i32_0 = arith.constant 0 : i32
    %c0_i32_1 = arith.constant 0 : i32
    return %arg0, %arg1, %c0_i32, %c0_i32_0 : i32, i32, i32, i32
  }
}

</mosaic_0001>

<llo_original>
// kernel: tpu_custom_call.1
$region0: #{tpu_custom_call.1}
  #allocation0 [shape = 'u32[]', space=smem, size = 0x4, offset = 0x4, fixed_abs, tag = 'smem constant byte address 0x4 - core index']
  #allocation1 [shape = 'u32[144,128]{1,0:T(1,128)}', space=vmem, size = 0x12000, scoped, tag = 'internal scratch']
  %s0 = inlined_call_operand.hbm [shape: f32[2,16,16,32], index: 0, kind: input, shape index: {}]
  %s1 = inlined_call_operand.vmem [shape: f32[32,64], index: 1, kind: input, shape index: {}]
  %s2 = inlined_call_operand.vmem [shape: f32[64,4], index: 2, kind: input, shape index: {}]
  %s3 = inlined_call_operand.vmem [shape: f32[4,64], index: 3, kind: input, shape index: {}]
  %s4 = inlined_call_operand.vmem [shape: f32[1,64], index: 4, kind: input, shape index: {}]
  %s5 = inlined_call_operand.vmem [shape: f32[1,64], index: 5, kind: input, shape index: {}]
  %s6 = inlined_call_operand.hbm [shape: f32[2,16,16,64], index: 6, kind: output, shape index: {}]
  %s7 = sld [smem:[#allocation0]]
  $region61: #{tpu_custom_call.1} parent=0
    _
  %s9 = ssub.s32 1, %s7
  %s10 = scalar_select 0, %s9, %s7
  $region1: #{tpu_custom_call.1} parent=0
    #allocation2 [shape = 'u8[262144]{0}', space=vmem, size = 0x40000, scoped, tag = 'input window, operand 0']
    #allocation3 [shape = 's32[2]{0}', space=sflag, size = 0x8, scoped, tag = 'scoped memory for tpu_custom_call.1']
    #allocation4 [shape = 's32[2]{0}', space=sflag, size = 0x8, scoped, tag = 'scoped memory for tpu_custom_call.1']
    #allocation5 [shape = 'u8[262144]{0}', space=vmem, size = 0x40000, scoped, tag = 'output window, operand 0']
    %11 = vsyncpa [#allocation3], 0
    %s12 = scalar_lea.sflag [#allocation3], 1
    %13 = vsyncpa %s12, 0
    %14 = vsyncpa [#allocation4], 0
    %s15 = scalar_lea.sflag [#allocation4], 1
    %16 = vsyncpa %s15, 0
    loop: start=0, step=1, limit=4
    $region2: #{tpu_custom_call.1} parent=1 // loop_pre_header
      _
    $region3: #{tpu_custom_call.1} parent=1 // loop_header
      %s18 = sphi 0, %s22
      %p19 = scmp.ge.s32.totalorder %s18, 4
      %s25 = sphi 0, %s37
      %s26 = sphi 0, %s33
      %s27 = sphi 0, %s25
      %s28 = sphi 0, %s26
      %s29 = sphi 0, %s27
      %s30 = sphi 0, %s28
      %s42 = sphi 0, %s44
      %s45 = sphi 0, %s42
      %s46 = sphi 0, %s45
      %s62 = sphi 0, %s46
      %s66 = sphi 0, %s66
      %s68 = sphi 0, %s66
      %s69 = sphi 0, %s68
      %s83 = sphi 0, %s69
      %s87 = sphi 0, %s87
      %s89 = sphi 0, %s87
      %s90 = sphi 0, %s89
      %s104 = sphi 0, %s90
      %s108 = sphi 0, %s108
      %s110 = sphi 0, %s108
      %s111 = sphi 0, %s110
      %s125 = sphi 0, %s111
      %s129 = sphi 0, %s129
      %s131 = sphi 0, %s129
      %s132 = sphi 0, %s131
      %s146 = sphi 0, %s132
      %s150 = sphi 0, %s150
      %s152 = sphi 0, %s150
      %s153 = sphi 0, %s152
      %s167 = sphi 0, %s153
      %s175 = sphi 0, %s177
      %s178 = sphi 0, %s175
      %s179 = sphi 0, %s178
      %s195 = sphi 0, %s179
    $region4: #{tpu_custom_call.1} parent=1 // loop_header_branch
      %21 = sbr.rel (%p19) target = $region8
    $region5: #{tpu_custom_call.1} parent=1 // loop_body
      %s23 = ssub.s32 %s18, 1
      %s24 = ssub.s32 %s18, 2
      %s31 = sadd.s32 1, %s26
      %p32 = scmp.ge.s32.totalorder %s31, 1
      %s33 = scalar_select %p32, 0, %s31
      %s34 = sadd.s32 1, %s25
      %s35 = scalar_select %p32, %s34, %s25
      %p36 = scmp.ge.s32.totalorder %s35, 2
      %s37 = scalar_select %p36, 0, %s35
      %s38 = ssub.s32 %s25, %s37
      %s39 = ssub.s32 %s26, %s33
      %s40 = sor.u32 %s38, %s39
      %p41 = scmp.eq.s32.totalorder %s40, 0
      %s43 = sadd.s32 %s42, 1
      %s44 = scalar_select %p41, %s42, %s43
      %p47 = pneg %p41
      %p48 = scmp.eq.s32.totalorder %s18, 1
      %p49 = por %p47, %p48
      %p50 = scmp.ne.s32.totalorder %s42, %s45
      %p51 = scmp.eq.s32.totalorder %s18, 0
      %p52 = por %p50, %p51
      %p53 = scmp.ne.s32.totalorder %s42, %s45
      %p54 = scmp.eq.s32.totalorder %s23, 1
      %p55 = por %p53, %p54
      %p56 = scmp.ne.s32.totalorder %s45, %s46
      %p57 = scmp.eq.s32.totalorder %s23, 0
      %p58 = por %p56, %p57
      %p59 = scmp.ne.s32.totalorder %s45, %s46
      %p60 = scmp.eq.s32.totalorder %s24, 1
      %p61 = por %p59, %p60
      %p63 = scmp.ne.s32.totalorder %s46, %s62
      %p64 = scmp.eq.s32.totalorder %s24, 0
      %p65 = por %p63, %p64
      %s67 = sadd.s32 %s66, 1
      %p70 = scmp.eq.s32.totalorder %s18, 1
      %p71 = scmp.ne.s32.totalorder %s66, %s68
      %p72 = scmp.eq.s32.totalorder %s18, 0
      %p73 = por %p71, %p72
      %p74 = scmp.ne.s32.totalorder %s66, %s68
      %p75 = scmp.eq.s32.totalorder %s23, 1
      %p76 = por %p74, %p75
      %p77 = scmp.ne.s32.totalorder %s68, %s69
      %p78 = scmp.eq.s32.totalorder %s23, 0
      %p79 = por %p77, %p78
      %p80 = scmp.ne.s32.totalorder %s68, %s69
      %p81 = scmp.eq.s32.totalorder %s24, 1
      %p82 = por %p80, %p81
      %p84 = scmp.ne.s32.totalorder %s69, %s83
      %p85 = scmp.eq.s32.totalorder %s24, 0
      %p86 = por %p84, %p85
      %s88 = sadd.s32 %s87, 1
      %p91 = scmp.eq.s32.totalorder %s18, 1
      %p92 = scmp.ne.s32.totalorder %s87, %s89
      %p93 = scmp.eq.s32.totalorder %s18, 0
      %p94 = por %p92, %p93
      %p95 = scmp.ne.s32.totalorder %s87, %s89
      %p96 = scmp.eq.s32.totalorder %s23, 1
      %p97 = por %p95, %p96
      %p98 = scmp.ne.s32.totalorder %s89, %s90
      %p99 = scmp.eq.s32.totalorder %s23, 0
      %p100 = por %p98, %p99
      %p101 = scmp.ne.s32.totalorder %s89, %s90
      %p102 = scmp.eq.s32.totalorder %s24, 1
      %p103 = por %p101, %p102
      %p105 = scmp.ne.s32.totalorder %s90, %s104
      %p106 = scmp.eq.s32.totalorder %s24, 0
      %p107 = por %p105, %p106
      %s109 = sadd.s32 %s108, 1
      %p112 = scmp.eq.s32.totalorder %s18, 1
      %p113 = scmp.ne.s32.totalorder %s108, %s110
      %p114 = scmp.eq.s32.totalorder %s18, 0
      %p115 = por %p113, %p114
      %p116 = scmp.ne.s32.totalorder %s108, %s110
      %p117 = scmp.eq.s32.totalorder %s23, 1
      %p118 = por %p116, %p117
      %p119 = scmp.ne.s32.totalorder %s110, %s111
      %p120 = scmp.eq.s32.totalorder %s23, 0
      %p121 = por %p119, %p120
      %p122 = scmp.ne.s32.totalorder %s110, %s111
      %p123 = scmp.eq.s32.totalorder %s24, 1
      %p124 = por %p122, %p123
      %p126 = scmp.ne.s32.totalorder %s111, %s125
      %p127 = scmp.eq.s32.totalorder %s24, 0
      %p128 = por %p126, %p127
      %s130 = sadd.s32 %s129, 1
      %p133 = scmp.eq.s32.totalorder %s18, 1
      %p134 = scmp.ne.s32.totalorder %s129, %s131
      %p135 = scmp.eq.s32.totalorder %s18, 0
      %p136 = por %p134, %p135
      %p137 = scmp.ne.s32.totalorder %s129, %s131
      %p138 = scmp.eq.s32.totalorder %s23, 1
      %p139 = por %p137, %p138
      %p140 = scmp.ne.s32.totalorder %s131, %s132
      %p141 = scmp.eq.s32.totalorder %s23, 0
      %p142 = por %p140, %p141
      %p143 = scmp.ne.s32.totalorder %s131, %s132
      %p144 = scmp.eq.s32.totalorder %s24, 1
      %p145 = por %p143, %p144
      %p147 = scmp.ne.s32.totalorder %s132, %s146
      %p148 = scmp.eq.s32.totalorder %s24, 0
      %p149 = por %p147, %p148
      %s151 = sadd.s32 %s150, 1
      %p154 = scmp.eq.s32.totalorder %s18, 1
      %p155 = scmp.ne.s32.totalorder %s150, %s152
      %p156 = scmp.eq.s32.totalorder %s18, 0
      %p157 = por %p155, %p156
      %p158 = scmp.ne.s32.totalorder %s150, %s152
      %p159 = scmp.eq.s32.totalorder %s23, 1
      %p160 = por %p158, %p159
      %p161 = scmp.ne.s32.totalorder %s152, %s153
      %p162 = scmp.eq.s32.totalorder %s23, 0
      %p163 = por %p161, %p162
      %p164 = scmp.ne.s32.totalorder %s152, %s153
      %p165 = scmp.eq.s32.totalorder %s24, 1
      %p166 = por %p164, %p165
      %p168 = scmp.ne.s32.totalorder %s153, %s167
      %p169 = scmp.eq.s32.totalorder %s24, 0
      %p170 = por %p168, %p169
      %s171 = ssub.s32 %s25, %s37
      %s172 = ssub.s32 %s26, %s33
      %s173 = sor.u32 %s171, %s172
      %p174 = scmp.eq.s32.totalorder %s173, 0
      %s176 = sadd.s32 %s175, 1
      %s177 = scalar_select %p174, %s175, %s176
      %p180 = pneg %p174
      %p181 = scmp.eq.s32.totalorder %s18, 1
      %p182 = por %p180, %p181
      %p183 = scmp.ne.s32.totalorder %s175, %s178
      %p184 = scmp.eq.s32.totalorder %s18, 0
      %p185 = por %p183, %p184
      %p186 = scmp.ne.s32.totalorder %s175, %s178
      %p187 = scmp.eq.s32.totalorder %s23, 1
      %p188 = por %p186, %p187
      %p189 = scmp.ne.s32.totalorder %s178, %s179
      %p190 = scmp.eq.s32.totalorder %s23, 0
      %p191 = por %p189, %p190
      %p192 = scmp.ne.s32.totalorder %s178, %s179
      %p193 = scmp.eq.s32.totalorder %s24, 1
      %p194 = por %p192, %p193
      %p196 = scmp.ne.s32.totalorder %s179, %s195
      %p197 = scmp.eq.s32.totalorder %s24, 0
      %p198 = por %p196, %p197
      %p199 = scmp.le.s32.totalorder 1, %s18
      %p200 = scmp.lt.s32.totalorder %s18, 3
      %p201 = pnand %p199, %p200
      %p202 = pneg %p201
      // Predicated region
      $region9: #{tpu_custom_call.1} parent=5 // pred_check
        _
      $region10: #{tpu_custom_call.1} parent=5 // pred_check_branch
        %204 = sbr.rel (%p201) target = $region12
      $region11: #{tpu_custom_call.1} parent=5 // pred_region
        %s205 = ssub.s32 %s18, 1
        // Predicated region
        $region13: #{tpu_custom_call.1} parent=11 // pred_check
          %p206 = pneg %p79
        $region14: #{tpu_custom_call.1} parent=11 // pred_check_branch
          %208 = sbr.rel (%p206) target = $region16
        $region15: #{tpu_custom_call.1} parent=11 // pred_region
          _
        $region16: #{tpu_custom_call.1} parent=11 // pred_fallthru
          _
        // Predicated region
        $region17: #{tpu_custom_call.1} parent=11 // pred_check
          %p209 = pneg %p100
        $region18: #{tpu_custom_call.1} parent=11 // pred_check_branch
          %211 = sbr.rel (%p209) target = $region20
        $region19: #{tpu_custom_call.1} parent=11 // pred_region
          _
        $region20: #{tpu_custom_call.1} parent=11 // pred_fallthru
          _
        // Predicated region
        $region21: #{tpu_custom_call.1} parent=11 // pred_check
          %p212 = pneg %p121
        $region22: #{tpu_custom_call.1} parent=11 // pred_check_branch
          %214 = sbr.rel (%p212) target = $region24
        $region23: #{tpu_custom_call.1} parent=11 // pred_region
          _
        $region24: #{tpu_custom_call.1} parent=11 // pred_fallthru
          _
        // Predicated region
        $region25: #{tpu_custom_call.1} parent=11 // pred_check
          %p215 = pneg %p142
        $region26: #{tpu_custom_call.1} parent=11 // pred_check_branch
          %217 = sbr.rel (%p215) target = $region28
        $region27: #{tpu_custom_call.1} parent=11 // pred_region
          _
        $region28: #{tpu_custom_call.1} parent=11 // pred_fallthru
          _
        // Predicated region
        $region29: #{tpu_custom_call.1} parent=11 // pred_check
          %p218 = pneg %p163
        $region30: #{tpu_custom_call.1} parent=11 // pred_check_branch
          %220 = sbr.rel (%p218) target = $region32
        $region31: #{tpu_custom_call.1} parent=11 // pred_region
          _
        $region32: #{tpu_custom_call.1} parent=11 // pred_fallthru
          _
      $region12: #{tpu_custom_call.1} parent=5 // pred_fallthru
        _
      %p221 = scmp.lt.s32.totalorder %s18, 2
      // Predicated region
      $region33: #{tpu_custom_call.1} parent=5 // pred_check
        %p222 = pneg %p221
      $region34: #{tpu_custom_call.1} parent=5 // pred_check_branch
        %224 = sbr.rel (%p222) target = $region36
      $region35: #{tpu_custom_call.1} parent=5 // pred_region
        // Predicated region
        $region37: #{tpu_custom_call.1} parent=35 // pred_check
          %p225 = pneg %p52
        $region38: #{tpu_custom_call.1} parent=35 // pred_check_branch
          %227 = sbr.rel (%p225) target = $region40
        $region39: #{tpu_custom_call.1} parent=35 // pred_region
          %s228 = sand.u32 %s42, 1
          %s229 = scalar_lea.sflag [#allocation3], %s228
          %s230 = sand.u32 %s42, 1
          %s231 = smul.addr %s230, 256
          %s232 = scalar_lea.vmem [#allocation2], %s231
          %s233 = smul.u32 16, %s26
          %s235 = ssub.s32 4096, 4096
          %236 = vsyncadd %s229, %s235
          %s237 = smul.addr %s233, 2
          %s238 = smul.addr %s25, 32
          %s239 = sadd.s32 %s237, %s238
          %s240 = smul.addr %s239, 128
          %s241 = scalar_lea.hbm %s0, %s240
          %s242 = sshll.u32 %s232, 4
          %s243 = int_to_ptr.vmem [resolvable:$true] %s242
          %248 = dma.hbm_to_vmem [thread:$0]  %s241, 4096, %s243, %s229, 128, 128, 8
        $region40: #{tpu_custom_call.1} parent=35 // pred_fallthru
          _
      $region36: #{tpu_custom_call.1} parent=5 // pred_fallthru
        _
      %p249 = scmp.le.s32.totalorder 1, %s18
      %p250 = scmp.lt.s32.totalorder %s18, 3
      %p251 = pnand %p249, %p250
      %p252 = pneg %p251
      // Predicated region
      $region41: #{tpu_custom_call.1} parent=5 // pred_check
        _
      $region42: #{tpu_custom_call.1} parent=5 // pred_check_branch
        %254 = sbr.rel (%p251) target = $region44
      $region43: #{tpu_custom_call.1} parent=5 // pred_region
        %s255 = ssub.s32 %s18, 1
        %s256 = sand.u32 %s45, 1
        %s257 = scalar_lea.sflag [#allocation3], %s256
        %s258 = sand.u32 %s45, 1
        %s259 = smul.addr %s258, 256
        %s260 = scalar_lea.vmem [#allocation2], %s259
        // Predicated region
        $region45: #{tpu_custom_call.1} parent=43 // pred_check
          %p261 = pneg %p58
        $region46: #{tpu_custom_call.1} parent=43 // pred_check_branch
          %263 = sbr.rel (%p261) target = $region48
        $region47: #{tpu_custom_call.1} parent=43 // pred_region
          %264 = dma.done %s257, 4096
        $region48: #{tpu_custom_call.1} parent=43 // pred_fallthru
          _
        %s265 = sand.u32 %s45, 1
        %s266 = scalar_lea.sflag [#allocation3], %s265
        %s267 = sand.u32 %s45, 1
        %s268 = smul.addr %s267, 256
        %s269 = scalar_lea.vmem [#allocation2], %s268
        %p270 = pneg %p58
        %p271 = pneg %p55
        %p272 = pneg %p79
        %p273 = pneg %p76
        %p274 = pneg %p100
        %p275 = pneg %p97
        %p276 = pneg %p121
        %p277 = pneg %p118
        %p278 = pneg %p142
        %p279 = pneg %p139
        %p280 = pneg %p163
        %p281 = pneg %p160
        %p282 = pneg %p191
        %p283 = pneg %p188
        %s284 = sand.u32 %s178, 1
        %s285 = scalar_lea.sflag [#allocation4], %s284
        %s286 = sand.u32 %s178, 1
        %s287 = smul.addr %s286, 256
        %s288 = scalar_lea.vmem [#allocation5], %s287
        %s289 = smul.u32 16, %s28
        %s290 = smul.u32 16, %s28
        %v291 = vld [vmem:[%s260] sm:$0xff]
        %v292 = vld [vmem:[%s260 + $0x8] sm:$0xff]
        %v293 = vld [vmem:[%s260 + $0x10] sm:$0xff]
        %v294 = vld [vmem:[%s260 + $0x18] sm:$0xff]
        %v295 = vld [vmem:[%s260 + $0x20] sm:$0xff]
        %v296 = vld [vmem:[%s260 + $0x28] sm:$0xff]
        %v297 = vld [vmem:[%s260 + $0x30] sm:$0xff]
        %v298 = vld [vmem:[%s260 + $0x38] sm:$0xff]
        %v299 = vld [vmem:[%s260 + $0x40] sm:$0xff]
        %v300 = vld [vmem:[%s260 + $0x48] sm:$0xff]
        %v301 = vld [vmem:[%s260 + $0x50] sm:$0xff]
        %v302 = vld [vmem:[%s260 + $0x58] sm:$0xff]
        %v303 = vld [vmem:[%s260 + $0x60] sm:$0xff]
        %v304 = vld [vmem:[%s260 + $0x68] sm:$0xff]
        %v305 = vld [vmem:[%s260 + $0x70] sm:$0xff]
        %v306 = vld [vmem:[%s260 + $0x78] sm:$0xff]
        %v307 = vld [vmem:[%s260 + $0x80] sm:$0xff]
        %v308 = vld [vmem:[%s260 + $0x88] sm:$0xff]
        %v309 = vld [vmem:[%s260 + $0x90] sm:$0xff]
        %v310 = vld [vmem:[%s260 + $0x98] sm:$0xff]
        %v311 = vld [vmem:[%s260 + $0xa0] sm:$0xff]
        %v312 = vld [vmem:[%s260 + $0xa8] sm:$0xff]
        %v313 = vld [vmem:[%s260 + $0xb0] sm:$0xff]
        %v314 = vld [vmem:[%s260 + $0xb8] sm:$0xff]
        %v315 = vld [vmem:[%s260 + $0xc0] sm:$0xff]
        %v316 = vld [vmem:[%s260 + $0xc8] sm:$0xff]
        %v317 = vld [vmem:[%s260 + $0xd0] sm:$0xff]
        %v318 = vld [vmem:[%s260 + $0xd8] sm:$0xff]
        %v319 = vld [vmem:[%s260 + $0xe0] sm:$0xff]
        %v320 = vld [vmem:[%s260 + $0xe8] sm:$0xff]
        %v321 = vld [vmem:[%s260 + $0xf0] sm:$0xff]
        %v322 = vld [vmem:[%s260 + $0xf8] sm:$0xff]
        %v323 = vld [vmem:[%s1] sm:$0xff]
        %v324 = vld [vmem:[%s1 + $0x8] sm:$0xff]
        %v325 = vld [vmem:[%s1 + $0x10] sm:$0xff]
        %v326 = vld [vmem:[%s1 + $0x18] sm:$0xff]
        %vm327 = vcmask 261120
        %v329 = vsel %vm327, %v291, 0
        %v332 = vsel %vm327, %v292, 0
        %v335 = vsel %vm327, %v293, 0
        %v338 = vsel %vm327, %v294, 0
        %v341 = vsel %vm327, %v295, 0
        %v344 = vsel %vm327, %v296, 0
        %v347 = vsel %vm327, %v297, 0
        %v350 = vsel %vm327, %v298, 0
        %v353 = vsel %vm327, %v299, 0
        %v356 = vsel %vm327, %v300, 0
        %v359 = vsel %vm327, %v301, 0
        %v362 = vsel %vm327, %v302, 0
        %v365 = vsel %vm327, %v303, 0
        %v368 = vsel %vm327, %v304, 0
        %v371 = vsel %vm327, %v305, 0
        %v374 = vsel %vm327, %v306, 0
        %v377 = vsel %vm327, %v307, 0
        %v380 = vsel %vm327, %v308, 0
        %v383 = vsel %vm327, %v309, 0
        %v386 = vsel %vm327, %v310, 0
        %v389 = vsel %vm327, %v311, 0
        %v392 = vsel %vm327, %v312, 0
        %v395 = vsel %vm327, %v313, 0
        %v398 = vsel %vm327, %v314, 0
        %v401 = vsel %vm327, %v315, 0
        %v404 = vsel %vm327, %v316, 0
        %v407 = vsel %vm327, %v317, 0
        %v410 = vsel %vm327, %v318, 0
        %v413 = vsel %vm327, %v319, 0
        %v416 = vsel %vm327, %v320, 0
        %v419 = vsel %vm327, %v321, 0
        %v422 = vsel %vm327, %v322, 0
        %424 = vmatprep.subr.mxu0 0.0
        %425 = vmatpush1.msra.mxu0 0.0
        %426 = vmatprep.subr.mxu0 0.0
        %427 = vmatpush1.msra.mxu0 0.0
        %428 = vmatprep.subr.mxu0 0.0
        %429 = vmatpush1.msra.mxu0 0.0
        %430 = vmatprep.subr.mxu0 0.0
        %431 = vmatpush1.msra.mxu0 0.0
        %432 = vmatprep.subr.mxu0 0.0
        %433 = vmatpush1.msra.mxu0 0.0
        %434 = vmatprep.subr.mxu0 0.0
        %435 = vmatpush1.msra.mxu0 0.0
        %436 = vmatprep.subr.mxu0 0.0
        %437 = vmatpush1.msra.mxu0 0.0
        %438 = vmatprep.subr.mxu0 0.0
        %439 = vmatpush1.msra.mxu0 0.0
        %440 = vmatprep.subr.mxu0 0.0
        %441 = vmatpush1.msra.mxu0 0.0
        %442 = vmatprep.subr.mxu0 0.0
        %443 = vmatpush1.msra.mxu0 0.0
        %444 = vmatprep.subr.mxu0 0.0
        %445 = vmatpush1.msra.mxu0 0.0
        %446 = vmatprep.subr.mxu0 0.0
        %447 = vmatpush1.msra.mxu0 0.0
        %448 = vmatprep.subr.mxu0 0.0
        %449 = vmatpush1.msra.mxu0 %v326
        %450 = vmatprep.subr.mxu0 0.0
        %451 = vmatpush1.msra.mxu0 %v325
        %452 = vmatprep.subr.mxu0 0.0
        %453 = vmatpush1.msra.mxu0 %v324
        %454 = vmatprep.subr.mxu0 0.0
        %455 = vmatpush1.msra.mxu0 %v323
        %456 = vmatprep.subr.mxu0 0.0
        %457 = vmatpush2.msra.mxu0 0.0
        %458 = vmatprep.subr.mxu0 0.0
        %459 = vmatpush2.msra.mxu0 0.0
        %460 = vmatprep.subr.mxu0 0.0
        %461 = vmatpush2.msra.mxu0 0.0
        %462 = vmatprep.subr.mxu0 0.0
        %463 = vmatpush2.msra.mxu0 0.0
        %464 = vmatprep.subr.mxu0 0.0
        %465 = vmatpush2.msra.mxu0 0.0
        %466 = vmatprep.subr.mxu0 0.0
        %467 = vmatpush2.msra.mxu0 0.0
        %468 = vmatprep.subr.mxu0 0.0
        %469 = vmatpush2.msra.mxu0 0.0
        %470 = vmatprep.subr.mxu0 0.0
        %471 = vmatpush2.msra.mxu0 0.0
        %472 = vmatprep.subr.mxu0 0.0
        %473 = vmatpush2.msra.mxu0 0.0
        %474 = vmatprep.subr.mxu0 0.0
        %475 = vmatpush2.msra.mxu0 0.0
        %476 = vmatprep.subr.mxu0 0.0
        %477 = vmatpush2.msra.mxu0 0.0
        %478 = vmatprep.subr.mxu0 0.0
        %479 = vmatpush2.msra.mxu0 0.0
        %480 = vmatprep.subr.mxu0 0.0
        %481 = vmatpush2.msra.mxu0 0.0
        %482 = vmatprep.subr.mxu0 0.0
        %483 = vmatpush2.msra.mxu0 0.0
        %484 = vmatprep.subr.mxu0 0.0
        %485 = vmatpush2.msra.mxu0 0.0
        %486 = vmatprep.subr.mxu0 0.0
        %487 = vmatpush2.msra.mxu0 0.0
        %488 = vmatprep.mubr.f32.mxu0 0.0
        %489 = vmatmul.mubr.f32.gmra.mxu0 %v329
        %v490 = vpop.f32.mrf.mxu0
        %v491 = vadd.f32 0.0, %v490
        %v492 = vpop.f32.mrf.mxu0
        %493 = vmatprep.mubr.f32.mxu0 0.0
        %494 = vmatmul.mubr.f32.gmra.mxu0 %v332
        %v495 = vpop.f32.mrf.mxu0
        %v496 = vadd.f32 0.0, %v495
        %v497 = vpop.f32.mrf.mxu0
        %498 = vmatprep.mubr.f32.mxu0 0.0
        %499 = vmatmul.mubr.f32.gmra.mxu0 %v335
        %v500 = vpop.f32.mrf.mxu0
        %v501 = vadd.f32 0.0, %v500
        %v502 = vpop.f32.mrf.mxu0
        %503 = vmatprep.mubr.f32.mxu0 0.0
        %504 = vmatmul.mubr.f32.gmra.mxu0 %v338
        %v505 = vpop.f32.mrf.mxu0
        %v506 = vadd.f32 0.0, %v505
        %v507 = vpop.f32.mrf.mxu0
        %508 = vmatprep.mubr.f32.mxu0 0.0
        %509 = vmatmul.mubr.f32.gmra.mxu0 %v341
        %v510 = vpop.f32.mrf.mxu0
        %v511 = vadd.f32 0.0, %v510
        %v512 = vpop.f32.mrf.mxu0
        %513 = vmatprep.mubr.f32.mxu0 0.0
        %514 = vmatmul.mubr.f32.gmra.mxu0 %v344
        %v515 = vpop.f32.mrf.mxu0
        %v516 = vadd.f32 0.0, %v515
        %v517 = vpop.f32.mrf.mxu0
        %518 = vmatprep.mubr.f32.mxu0 0.0
        %519 = vmatmul.mubr.f32.gmra.mxu0 %v347
        %v520 = vpop.f32.mrf.mxu0
        %v521 = vadd.f32 0.0, %v520
        %v522 = vpop.f32.mrf.mxu0
        %523 = vmatprep.mubr.f32.mxu0 0.0
        %524 = vmatmul.mubr.f32.gmra.mxu0 %v350
        %v525 = vpop.f32.mrf.mxu0
        %v526 = vadd.f32 0.0, %v525
        %v527 = vpop.f32.mrf.mxu0
        %528 = vmatprep.mubr.f32.mxu0 0.0
        %529 = vmatmul.mubr.f32.gmra.mxu0 %v353
        %v530 = vpop.f32.mrf.mxu0
        %v531 = vadd.f32 0.0, %v530
        %v532 = vpop.f32.mrf.mxu0
        %533 = vmatprep.mubr.f32.mxu0 0.0
        %534 = vmatmul.mubr.f32.gmra.mxu0 %v356
        %v535 = vpop.f32.mrf.mxu0
        %v536 = vadd.f32 0.0, %v535
        %v537 = vpop.f32.mrf.mxu0
        %538 = vmatprep.mubr.f32.mxu0 0.0
        %539 = vmatmul.mubr.f32.gmra.mxu0 %v359
        %v540 = vpop.f32.mrf.mxu0
        %v541 = vadd.f32 0.0, %v540
        %v542 = vpop.f32.mrf.mxu0
        %543 = vmatprep.mubr.f32.mxu0 0.0
        %544 = vmatmul.mubr.f32.gmra.mxu0 %v362
        %v545 = vpop.f32.mrf.mxu0
        %v546 = vadd.f32 0.0, %v545
        %v547 = vpop.f32.mrf.mxu0
        %548 = vmatprep.mubr.f32.mxu0 0.0
        %549 = vmatmul.mubr.f32.gmra.mxu0 %v365
        %v550 = vpop.f32.mrf.mxu0
        %v551 = vadd.f32 0.0, %v550
        %v552 = vpop.f32.mrf.mxu0
        %553 = vmatprep.mubr.f32.mxu0 0.0
        %554 = vmatmul.mubr.f32.gmra.mxu0 %v368
        %v555 = vpop.f32.mrf.mxu0
        %v556 = vadd.f32 0.0, %v555
        %v557 = vpop.f32.mrf.mxu0
        %558 = vmatprep.mubr.f32.mxu0 0.0
        %559 = vmatmul.mubr.f32.gmra.mxu0 %v371
        %v560 = vpop.f32.mrf.mxu0
        %v561 = vadd.f32 0.0, %v560
        %v562 = vpop.f32.mrf.mxu0
        %563 = vmatprep.mubr.f32.mxu0 0.0
        %564 = vmatmul.mubr.f32.gmra.mxu0 %v374
        %v565 = vpop.f32.mrf.mxu0
        %v566 = vadd.f32 0.0, %v565
        %v567 = vpop.f32.mrf.mxu0
        %568 = vmatprep.mubr.f32.mxu0 0.0
        %569 = vmatmul.mubr.f32.gmra.mxu0 %v377
        %v570 = vpop.f32.mrf.mxu0
        %v571 = vadd.f32 0.0, %v570
        %v572 = vpop.f32.mrf.mxu0
        %573 = vmatprep.mubr.f32.mxu0 0.0
        %574 = vmatmul.mubr.f32.gmra.mxu0 %v380
        %v575 = vpop.f32.mrf.mxu0
        %v576 = vadd.f32 0.0, %v575
        %v577 = vpop.f32.mrf.mxu0
        %578 = vmatprep.mubr.f32.mxu0 0.0
        %579 = vmatmul.mubr.f32.gmra.mxu0 %v383
        %v580 = vpop.f32.mrf.mxu0
        %v581 = vadd.f32 0.0, %v580
        %v582 = vpop.f32.mrf.mxu0
        %583 = vmatprep.mubr.f32.mxu0 0.0
        %584 = vmatmul.mubr.f32.gmra.mxu0 %v386
        %v585 = vpop.f32.mrf.mxu0
        %v586 = vadd.f32 0.0, %v585
        %v587 = vpop.f32.mrf.mxu0
        %588 = vmatprep.mubr.f32.mxu0 0.0
        %589 = vmatmul.mubr.f32.gmra.mxu0 %v389
        %v590 = vpop.f32.mrf.mxu0
        %v591 = vadd.f32 0.0, %v590
        %v592 = vpop.f32.mrf.mxu0
        %593 = vmatprep.mubr.f32.mxu0 0.0
        %594 = vmatmul.mubr.f32.gmra.mxu0 %v392
        %v595 = vpop.f32.mrf.mxu0
        %v596 = vadd.f32 0.0, %v595
        %v597 = vpop.f32.mrf.mxu0
        %598 = vmatprep.mubr.f32.mxu0 0.0
        %599 = vmatmul.mubr.f32.gmra.mxu0 %v395
        %v600 = vpop.f32.mrf.mxu0
        %v601 = vadd.f32 0.0, %v600
        %v602 = vpop.f32.mrf.mxu0
        %603 = vmatprep.mubr.f32.mxu0 0.0
        %604 = vmatmul.mubr.f32.gmra.mxu0 %v398
        %v605 = vpop.f32.mrf.mxu0
        %v606 = vadd.f32 0.0, %v605
        %v607 = vpop.f32.mrf.mxu0
        %608 = vmatprep.mubr.f32.mxu0 0.0
        %609 = vmatmul.mubr.f32.gmra.mxu0 %v401
        %v610 = vpop.f32.mrf.mxu0
        %v611 = vadd.f32 0.0, %v610
        %v612 = vpop.f32.mrf.mxu0
        %613 = vmatprep.mubr.f32.mxu0 0.0
        %614 = vmatmul.mubr.f32.gmra.mxu0 %v404
        %v615 = vpop.f32.mrf.mxu0
        %v616 = vadd.f32 0.0, %v615
        %v617 = vpop.f32.mrf.mxu0
        %618 = vmatprep.mubr.f32.mxu0 0.0
        %619 = vmatmul.mubr.f32.gmra.mxu0 %v407
        %v620 = vpop.f32.mrf.mxu0
        %v621 = vadd.f32 0.0, %v620
        %v622 = vpop.f32.mrf.mxu0
        %623 = vmatprep.mubr.f32.mxu0 0.0
        %624 = vmatmul.mubr.f32.gmra.mxu0 %v410
        %v625 = vpop.f32.mrf.mxu0
        %v626 = vadd.f32 0.0, %v625
        %v627 = vpop.f32.mrf.mxu0
        %628 = vmatprep.mubr.f32.mxu0 0.0
        %629 = vmatmul.mubr.f32.gmra.mxu0 %v413
        %v630 = vpop.f32.mrf.mxu0
        %v631 = vadd.f32 0.0, %v630
        %v632 = vpop.f32.mrf.mxu0
        %633 = vmatprep.mubr.f32.mxu0 0.0
        %634 = vmatmul.mubr.f32.gmra.mxu0 %v416
        %v635 = vpop.f32.mrf.mxu0
        %v636 = vadd.f32 0.0, %v635
        %v637 = vpop.f32.mrf.mxu0
        %638 = vmatprep.mubr.f32.mxu0 0.0
        %639 = vmatmul.mubr.f32.gmra.mxu0 %v419
        %v640 = vpop.f32.mrf.mxu0
        %v641 = vadd.f32 0.0, %v640
        %v642 = vpop.f32.mrf.mxu0
        %643 = vmatprep.mubr.f32.mxu0 0.0
        %644 = vmatmul.mubr.f32.gmra.mxu0 %v422
        %v645 = vpop.f32.mrf.mxu0
        %v646 = vadd.f32 0.0, %v645
        %v647 = vpop.f32.mrf.mxu0
        %648 = vdwg.mxu0
        %v649 = vld [vmem:[%s2] sm:$0xff]
        %v650 = vld [vmem:[%s2 + $0x8] sm:$0xff]
        %v651 = vld [vmem:[%s2 + $0x10] sm:$0xff]
        %v652 = vld [vmem:[%s2 + $0x18] sm:$0xff]
        %v653 = vld [vmem:[%s2 + $0x20] sm:$0xff]
        %v654 = vld [vmem:[%s2 + $0x28] sm:$0xff]
        %v655 = vld [vmem:[%s2 + $0x30] sm:$0xff]
        %v656 = vld [vmem:[%s2 + $0x38] sm:$0xff]
        %vm657 = vcmask 523264
        %v659 = vsel %vm657, %v491, 0
        %v662 = vsel %vm657, %v496, 0
        %v665 = vsel %vm657, %v501, 0
        %v668 = vsel %vm657, %v506, 0
        %v671 = vsel %vm657, %v511, 0
        %v674 = vsel %vm657, %v516, 0
        %v677 = vsel %vm657, %v521, 0
        %v680 = vsel %vm657, %v526, 0
        %v683 = vsel %vm657, %v531, 0
        %v686 = vsel %vm657, %v536, 0
        %v689 = vsel %vm657, %v541, 0
        %v692 = vsel %vm657, %v546, 0
        %v695 = vsel %vm657, %v551, 0
        %v698 = vsel %vm657, %v556, 0
        %v701 = vsel %vm657, %v561, 0
        %v704 = vsel %vm657, %v566, 0
        %v707 = vsel %vm657, %v571, 0
        %v710 = vsel %vm657, %v576, 0
        %v713 = vsel %vm657, %v581, 0
        %v716 = vsel %vm657, %v586, 0
        %v719 = vsel %vm657, %v591, 0
        %v722 = vsel %vm657, %v596, 0
        %v725 = vsel %vm657, %v601, 0
        %v728 = vsel %vm657, %v606, 0
        %v731 = vsel %vm657, %v611, 0
        %v734 = vsel %vm657, %v616, 0
        %v737 = vsel %vm657, %v621, 0
        %v740 = vsel %vm657, %v626, 0
        %v743 = vsel %vm657, %v631, 0
        %v746 = vsel %vm657, %v636, 0
        %v749 = vsel %vm657, %v641, 0
        %v752 = vsel %vm657, %v646, 0
        %754 = vmatprep.subr.mxu0 0.0
        %755 = vmatpush1.msra.mxu0 0.0
        %756 = vmatprep.subr.mxu0 0.0
        %757 = vmatpush1.msra.mxu0 0.0
        %758 = vmatprep.subr.mxu0 0.0
        %759 = vmatpush1.msra.mxu0 0.0
        %760 = vmatprep.subr.mxu0 0.0
        %761 = vmatpush1.msra.mxu0 0.0
        %762 = vmatprep.subr.mxu0 0.0
        %763 = vmatpush1.msra.mxu0 0.0
        %764 = vmatprep.subr.mxu0 0.0
        %765 = vmatpush1.msra.mxu0 0.0
        %766 = vmatprep.subr.mxu0 0.0
        %767 = vmatpush1.msra.mxu0 0.0
        %768 = vmatprep.subr.mxu0 0.0
        %769 = vmatpush1.msra.mxu0 0.0
        %770 = vmatprep.subr.mxu0 0.0
        %771 = vmatpush1.msra.mxu0 %v656
        %772 = vmatprep.subr.mxu0 0.0
        %773 = vmatpush1.msra.mxu0 %v655
        %774 = vmatprep.subr.mxu0 0.0
        %775 = vmatpush1.msra.mxu0 %v654
        %776 = vmatprep.subr.mxu0 0.0
        %777 = vmatpush1.msra.mxu0 %v653
        %778 = vmatprep.subr.mxu0 0.0
        %779 = vmatpush1.msra.mxu0 %v652
        %780 = vmatprep.subr.mxu0 0.0
        %781 = vmatpush1.msra.mxu0 %v651
        %782 = vmatprep.subr.mxu0 0.0
        %783 = vmatpush1.msra.mxu0 %v650
        %784 = vmatprep.subr.mxu0 0.0
        %785 = vmatpush1.msra.mxu0 %v649
        %786 = vmatprep.subr.mxu0 0.0
        %787 = vmatpush2.msra.mxu0 0.0
        %788 = vmatprep.subr.mxu0 0.0
        %789 = vmatpush2.msra.mxu0 0.0
        %790 = vmatprep.subr.mxu0 0.0
        %791 = vmatpush2.msra.mxu0 0.0
        %792 = vmatprep.subr.mxu0 0.0
        %793 = vmatpush2.msra.mxu0 0.0
        %794 = vmatprep.subr.mxu0 0.0
        %795 = vmatpush2.msra.mxu0 0.0
        %796 = vmatprep.subr.mxu0 0.0
        %797 = vmatpush2.msra.mxu0 0.0
        %798 = vmatprep.subr.mxu0 0.0
        %799 = vmatpush2.msra.mxu0 0.0
        %800 = vmatprep.subr.mxu0 0.0
        %801 = vmatpush2.msra.mxu0 0.0
        %802 = vmatprep.subr.mxu0 0.0
        %803 = vmatpush2.msra.mxu0 0.0
        %804 = vmatprep.subr.mxu0 0.0
        %805 = vmatpush2.msra.mxu0 0.0
        %806 = vmatprep.subr.mxu0 0.0
        %807 = vmatpush2.msra.mxu0 0.0
        %808 = vmatprep.subr.mxu0 0.0
        %809 = vmatpush2.msra.mxu0 0.0
        %810 = vmatprep.subr.mxu0 0.0
        %811 = vmatpush2.msra.mxu0 0.0
        %812 = vmatprep.subr.mxu0 0.0
        %813 = vmatpush2.msra.mxu0 0.0
        %814 = vmatprep.subr.mxu0 0.0
        %815 = vmatpush2.msra.mxu0 0.0
        %816 = vmatprep.subr.mxu0 0.0
        %817 = vmatpush2.msra.mxu0 0.0
        %818 = vmatprep.mubr.f32.mxu0 0.0
        %819 = vmatmul.mubr.f32.gmra.mxu0 %v659
        %v820 = vpop.f32.mrf.mxu0
        %v821 = vadd.f32 0.0, %v820
        %v822 = vpop.f32.mrf.mxu0
        %823 = vmatprep.mubr.f32.mxu0 0.0
        %824 = vmatmul.mubr.f32.gmra.mxu0 %v662
        %v825 = vpop.f32.mrf.mxu0
        %v826 = vadd.f32 0.0, %v825
        %v827 = vpop.f32.mrf.mxu0
        %828 = vmatprep.mubr.f32.mxu0 0.0
        %829 = vmatmul.mubr.f32.gmra.mxu0 %v665
        %v830 = vpop.f32.mrf.mxu0
        %v831 = vadd.f32 0.0, %v830
        %v832 = vpop.f32.mrf.mxu0
        %833 = vmatprep.mubr.f32.mxu0 0.0
        %834 = vmatmul.mubr.f32.gmra.mxu0 %v668
        %v835 = vpop.f32.mrf.mxu0
        %v836 = vadd.f32 0.0, %v835
        %v837 = vpop.f32.mrf.mxu0
        %838 = vmatprep.mubr.f32.mxu0 0.0
        %839 = vmatmul.mubr.f32.gmra.mxu0 %v671
        %v840 = vpop.f32.mrf.mxu0
        %v841 = vadd.f32 0.0, %v840
        %v842 = vpop.f32.mrf.mxu0
        %843 = vmatprep.mubr.f32.mxu0 0.0
        %844 = vmatmul.mubr.f32.gmra.mxu0 %v674
        %v845 = vpop.f32.mrf.mxu0
        %v846 = vadd.f32 0.0, %v845
        %v847 = vpop.f32.mrf.mxu0
        %848 = vmatprep.mubr.f32.mxu0 0.0
        %849 = vmatmul.mubr.f32.gmra.mxu0 %v677
        %v850 = vpop.f32.mrf.mxu0
        %v851 = vadd.f32 0.0, %v850
        %v852 = vpop.f32.mrf.mxu0
        %853 = vmatprep.mubr.f32.mxu0 0.0
        %854 = vmatmul.mubr.f32.gmra.mxu0 %v680
        %v855 = vpop.f32.mrf.mxu0
        %v856 = vadd.f32 0.0, %v855
        %v857 = vpop.f32.mrf.mxu0
        %858 = vmatprep.mubr.f32.mxu0 0.0
        %859 = vmatmul.mubr.f32.gmra.mxu0 %v683
        %v860 = vpop.f32.mrf.mxu0
        %v861 = vadd.f32 0.0, %v860
        %v862 = vpop.f32.mrf.mxu0
        %863 = vmatprep.mubr.f32.mxu0 0.0
        %864 = vmatmul.mubr.f32.gmra.mxu0 %v686
        %v865 = vpop.f32.mrf.mxu0
        %v866 = vadd.f32 0.0, %v865
        %v867 = vpop.f32.mrf.mxu0
        %868 = vmatprep.mubr.f32.mxu0 0.0
        %869 = vmatmul.mubr.f32.gmra.mxu0 %v689
        %v870 = vpop.f32.mrf.mxu0
        %v871 = vadd.f32 0.0, %v870
        %v872 = vpop.f32.mrf.mxu0
        %873 = vmatprep.mubr.f32.mxu0 0.0
        %874 = vmatmul.mubr.f32.gmra.mxu0 %v692
        %v875 = vpop.f32.mrf.mxu0
        %v876 = vadd.f32 0.0, %v875
        %v877 = vpop.f32.mrf.mxu0
        %878 = vmatprep.mubr.f32.mxu0 0.0
        %879 = vmatmul.mubr.f32.gmra.mxu0 %v695
        %v880 = vpop.f32.mrf.mxu0
        %v881 = vadd.f32 0.0, %v880
        %v882 = vpop.f32.mrf.mxu0
        %883 = vmatprep.mubr.f32.mxu0 0.0
        %884 = vmatmul.mubr.f32.gmra.mxu0 %v698
        %v885 = vpop.f32.mrf.mxu0
        %v886 = vadd.f32 0.0, %v885
        %v887 = vpop.f32.mrf.mxu0
        %888 = vmatprep.mubr.f32.mxu0 0.0
        %889 = vmatmul.mubr.f32.gmra.mxu0 %v701
        %v890 = vpop.f32.mrf.mxu0
        %v891 = vadd.f32 0.0, %v890
        %v892 = vpop.f32.mrf.mxu0
        %893 = vmatprep.mubr.f32.mxu0 0.0
        %894 = vmatmul.mubr.f32.gmra.mxu0 %v704
        %v895 = vpop.f32.mrf.mxu0
        %v896 = vadd.f32 0.0, %v895
        %v897 = vpop.f32.mrf.mxu0
        %898 = vmatprep.mubr.f32.mxu0 0.0
        %899 = vmatmul.mubr.f32.gmra.mxu0 %v707
        %v900 = vpop.f32.mrf.mxu0
        %v901 = vadd.f32 0.0, %v900
        %v902 = vpop.f32.mrf.mxu0
        %903 = vmatprep.mubr.f32.mxu0 0.0
        %904 = vmatmul.mubr.f32.gmra.mxu0 %v710
        %v905 = vpop.f32.mrf.mxu0
        %v906 = vadd.f32 0.0, %v905
        %v907 = vpop.f32.mrf.mxu0
        %908 = vmatprep.mubr.f32.mxu0 0.0
        %909 = vmatmul.mubr.f32.gmra.mxu0 %v713
        %v910 = vpop.f32.mrf.mxu0
        %v911 = vadd.f32 0.0, %v910
        %v912 = vpop.f32.mrf.mxu0
        %913 = vmatprep.mubr.f32.mxu0 0.0
        %914 = vmatmul.mubr.f32.gmra.mxu0 %v716
        %v915 = vpop.f32.mrf.mxu0
        %v916 = vadd.f32 0.0, %v915
        %v917 = vpop.f32.mrf.mxu0
        %918 = vmatprep.mubr.f32.mxu0 0.0
        %919 = vmatmul.mubr.f32.gmra.mxu0 %v719
        %v920 = vpop.f32.mrf.mxu0
        %v921 = vadd.f32 0.0, %v920
        %v922 = vpop.f32.mrf.mxu0
        %923 = vmatprep.mubr.f32.mxu0 0.0
        %924 = vmatmul.mubr.f32.gmra.mxu0 %v722
        %v925 = vpop.f32.mrf.mxu0
        %v926 = vadd.f32 0.0, %v925
        %v927 = vpop.f32.mrf.mxu0
        %928 = vmatprep.mubr.f32.mxu0 0.0
        %929 = vmatmul.mubr.f32.gmra.mxu0 %v725
        %v930 = vpop.f32.mrf.mxu0
        %v931 = vadd.f32 0.0, %v930
        %v932 = vpop.f32.mrf.mxu0
        %933 = vmatprep.mubr.f32.mxu0 0.0
        %934 = vmatmul.mubr.f32.gmra.mxu0 %v728
        %v935 = vpop.f32.mrf.mxu0
        %v936 = vadd.f32 0.0, %v935
        %v937 = vpop.f32.mrf.mxu0
        %938 = vmatprep.mubr.f32.mxu0 0.0
        %939 = vmatmul.mubr.f32.gmra.mxu0 %v731
        %v940 = vpop.f32.mrf.mxu0
        %v941 = vadd.f32 0.0, %v940
        %v942 = vpop.f32.mrf.mxu0
        %943 = vmatprep.mubr.f32.mxu0 0.0
        %944 = vmatmul.mubr.f32.gmra.mxu0 %v734
        %v945 = vpop.f32.mrf.mxu0
        %v946 = vadd.f32 0.0, %v945
        %v947 = vpop.f32.mrf.mxu0
        %948 = vmatprep.mubr.f32.mxu0 0.0
        %949 = vmatmul.mubr.f32.gmra.mxu0 %v737
        %v950 = vpop.f32.mrf.mxu0
        %v951 = vadd.f32 0.0, %v950
        %v952 = vpop.f32.mrf.mxu0
        %953 = vmatprep.mubr.f32.mxu0 0.0
        %954 = vmatmul.mubr.f32.gmra.mxu0 %v740
        %v955 = vpop.f32.mrf.mxu0
        %v956 = vadd.f32 0.0, %v955
        %v957 = vpop.f32.mrf.mxu0
        %958 = vmatprep.mubr.f32.mxu0 0.0
        %959 = vmatmul.mubr.f32.gmra.mxu0 %v743
        %v960 = vpop.f32.mrf.mxu0
        %v961 = vadd.f32 0.0, %v960
        %v962 = vpop.f32.mrf.mxu0
        %963 = vmatprep.mubr.f32.mxu0 0.0
        %964 = vmatmul.mubr.f32.gmra.mxu0 %v746
        %v965 = vpop.f32.mrf.mxu0
        %v966 = vadd.f32 0.0, %v965
        %v967 = vpop.f32.mrf.mxu0
        %968 = vmatprep.mubr.f32.mxu0 0.0
        %969 = vmatmul.mubr.f32.gmra.mxu0 %v749
        %v970 = vpop.f32.mrf.mxu0
        %v971 = vadd.f32 0.0, %v970
        %v972 = vpop.f32.mrf.mxu0
        %973 = vmatprep.mubr.f32.mxu0 0.0
        %974 = vmatmul.mubr.f32.gmra.mxu0 %v752
        %v975 = vpop.f32.mrf.mxu0
        %v976 = vadd.f32 0.0, %v975
        %v977 = vpop.f32.mrf.mxu0
        %978 = vdwg.mxu0
        %v979 = vmul.f32 %v821, 0.0625
        %v980 = vmul.f32 %v826, 0.0625
        %v981 = vmul.f32 %v831, 0.0625
        %v982 = vmul.f32 %v836, 0.0625
        %v983 = vmul.f32 %v841, 0.0625
        %v984 = vmul.f32 %v846, 0.0625
        %v985 = vmul.f32 %v851, 0.0625
        %v986 = vmul.f32 %v856, 0.0625
        %v987 = vmul.f32 %v861, 0.0625
        %v988 = vmul.f32 %v866, 0.0625
        %v989 = vmul.f32 %v871, 0.0625
        %v990 = vmul.f32 %v876, 0.0625
        %v991 = vmul.f32 %v881, 0.0625
        %v992 = vmul.f32 %v886, 0.0625
        %v993 = vmul.f32 %v891, 0.0625
        %v994 = vmul.f32 %v896, 0.0625
        %v995 = vmul.f32 %v901, 0.0625
        %v996 = vmul.f32 %v906, 0.0625
        %v997 = vmul.f32 %v911, 0.0625
        %v998 = vmul.f32 %v916, 0.0625
        %v999 = vmul.f32 %v921, 0.0625
        %v1000 = vmul.f32 %v926, 0.0625
        %v1001 = vmul.f32 %v931, 0.0625
        %v1002 = vmul.f32 %v936, 0.0625
        %v1003 = vmul.f32 %v941, 0.0625
        %v1004 = vmul.f32 %v946, 0.0625
        %v1005 = vmul.f32 %v951, 0.0625
        %v1006 = vmul.f32 %v956, 0.0625
        %v1007 = vmul.f32 %v961, 0.0625
        %v1008 = vmul.f32 %v966, 0.0625
        %v1009 = vmul.f32 %v971, 0.0625
        %v1010 = vmul.f32 %v976, 0.0625
        %v1011 = vld [vmem:[%s3] sm:$0xf]
        %vm1012 = vcmask 31744
        %v1014 = vsel %vm1012, %v979, 0
        %v1017 = vsel %vm1012, %v980, 0
        %v1020 = vsel %vm1012, %v981, 0
        %v1023 = vsel %vm1012, %v982, 0
        %v1026 = vsel %vm1012, %v983, 0
        %v1029 = vsel %vm1012, %v984, 0
        %v1032 = vsel %vm1012, %v985, 0
        %v1035 = vsel %vm1012, %v986, 0
        %v1038 = vsel %vm1012, %v987, 0
        %v1041 = vsel %vm1012, %v988, 0
        %v1044 = vsel %vm1012, %v989, 0
        %v1047 = vsel %vm1012, %v990, 0
        %v1050 = vsel %vm1012, %v991, 0
        %v1053 = vsel %vm1012, %v992, 0
        %v1056 = vsel %vm1012, %v993, 0
        %v1059 = vsel %vm1012, %v994, 0
        %v1062 = vsel %vm1012, %v995, 0
        %v1065 = vsel %vm1012, %v996, 0
        %v1068 = vsel %vm1012, %v997, 0
        %v1071 = vsel %vm1012, %v998, 0
        %v1074 = vsel %vm1012, %v999, 0
        %v1077 = vsel %vm1012, %v1000, 0
        %v1080 = vsel %vm1012, %v1001, 0
        %v1083 = vsel %vm1012, %v1002, 0
        %v1086 = vsel %vm1012, %v1003, 0
        %v1089 = vsel %vm1012, %v1004, 0
        %v1092 = vsel %vm1012, %v1005, 0
        %v1095 = vsel %vm1012, %v1006, 0
        %v1098 = vsel %vm1012, %v1007, 0
        %v1101 = vsel %vm1012, %v1008, 0
        %v1104 = vsel %vm1012, %v1009, 0
        %v1107 = vsel %vm1012, %v1010, 0
        %vm1109 = vcmask 1043456
        %v1111 = vsel %vm1109, %v1011, 0
        %1113 = vmatprep.subr.mxu0 0.0
        %1114 = vmatpush1.msra.mxu0 0.0
        %1115 = vmatprep.subr.mxu0 0.0
        %1116 = vmatpush1.msra.mxu0 0.0
        %1117 = vmatprep.subr.mxu0 0.0
        %1118 = vmatpush1.msra.mxu0 0.0
        %1119 = vmatprep.subr.mxu0 0.0
        %1120 = vmatpush1.msra.mxu0 0.0
        %1121 = vmatprep.subr.mxu0 0.0
        %1122 = vmatpush1.msra.mxu0 0.0
        %1123 = vmatprep.subr.mxu0 0.0
        %1124 = vmatpush1.msra.mxu0 0.0
        %1125 = vmatprep.subr.mxu0 0.0
        %1126 = vmatpush1.msra.mxu0 0.0
        %1127 = vmatprep.subr.mxu0 0.0
        %1128 = vmatpush1.msra.mxu0 0.0
        %1129 = vmatprep.subr.mxu0 0.0
        %1130 = vmatpush1.msra.mxu0 0.0
        %1131 = vmatprep.subr.mxu0 0.0
        %1132 = vmatpush1.msra.mxu0 0.0
        %1133 = vmatprep.subr.mxu0 0.0
        %1134 = vmatpush1.msra.mxu0 0.0
        %1135 = vmatprep.subr.mxu0 0.0
        %1136 = vmatpush1.msra.mxu0 0.0
        %1137 = vmatprep.subr.mxu0 0.0
        %1138 = vmatpush1.msra.mxu0 0.0
        %1139 = vmatprep.subr.mxu0 0.0
        %1140 = vmatpush1.msra.mxu0 0.0
        %1141 = vmatprep.subr.mxu0 0.0
        %1142 = vmatpush1.msra.mxu0 0.0
        %1143 = vmatprep.subr.mxu0 0.0
        %1144 = vmatpush1.msra.mxu0 %v1111
        %1145 = vmatprep.subr.mxu0 0.0
        %1146 = vmatpush2.msra.mxu0 0.0
        %1147 = vmatprep.subr.mxu0 0.0
        %1148 = vmatpush2.msra.mxu0 0.0
        %1149 = vmatprep.subr.mxu0 0.0
        %1150 = vmatpush2.msra.mxu0 0.0
        %1151 = vmatprep.subr.mxu0 0.0
        %1152 = vmatpush2.msra.mxu0 0.0
        %1153 = vmatprep.subr.mxu0 0.0
        %1154 = vmatpush2.msra.mxu0 0.0
        %1155 = vmatprep.subr.mxu0 0.0
        %1156 = vmatpush2.msra.mxu0 0.0
        %1157 = vmatprep.subr.mxu0 0.0
        %1158 = vmatpush2.msra.mxu0 0.0
        %1159 = vmatprep.subr.mxu0 0.0
        %1160 = vmatpush2.msra.mxu0 0.0
        %1161 = vmatprep.subr.mxu0 0.0
        %1162 = vmatpush2.msra.mxu0 0.0
        %1163 = vmatprep.subr.mxu0 0.0
        %1164 = vmatpush2.msra.mxu0 0.0
        %1165 = vmatprep.subr.mxu0 0.0
        %1166 = vmatpush2.msra.mxu0 0.0
        %1167 = vmatprep.subr.mxu0 0.0
        %1168 = vmatpush2.msra.mxu0 0.0
        %1169 = vmatprep.subr.mxu0 0.0
        %1170 = vmatpush2.msra.mxu0 0.0
        %1171 = vmatprep.subr.mxu0 0.0
        %1172 = vmatpush2.msra.mxu0 0.0
        %1173 = vmatprep.subr.mxu0 0.0
        %1174 = vmatpush2.msra.mxu0 0.0
        %1175 = vmatprep.subr.mxu0 0.0
        %1176 = vmatpush2.msra.mxu0 0.0
        %1177 = vmatprep.mubr.f32.mxu0 0.0
        %1178 = vmatmul.mubr.f32.gmra.mxu0 %v1014
        %v1179 = vpop.f32.mrf.mxu0
        %v1180 = vadd.f32 0.0, %v1179
        %v1181 = vpop.f32.mrf.mxu0
        %1182 = vmatprep.mubr.f32.mxu0 0.0
        %1183 = vmatmul.mubr.f32.gmra.mxu0 %v1017
        %v1184 = vpop.f32.mrf.mxu0
        %v1185 = vadd.f32 0.0, %v1184
        %v1186 = vpop.f32.mrf.mxu0
        %1187 = vmatprep.mubr.f32.mxu0 0.0
        %1188 = vmatmul.mubr.f32.gmra.mxu0 %v1020
        %v1189 = vpop.f32.mrf.mxu0
        %v1190 = vadd.f32 0.0, %v1189
        %v1191 = vpop.f32.mrf.mxu0
        %1192 = vmatprep.mubr.f32.mxu0 0.0
        %1193 = vmatmul.mubr.f32.gmra.mxu0 %v1023
        %v1194 = vpop.f32.mrf.mxu0
        %v1195 = vadd.f32 0.0, %v1194
        %v1196 = vpop.f32.mrf.mxu0
        %1197 = vmatprep.mubr.f32.mxu0 0.0
        %1198 = vmatmul.mubr.f32.gmra.mxu0 %v1026
        %v1199 = vpop.f32.mrf.mxu0
        %v1200 = vadd.f32 0.0, %v1199
        %v1201 = vpop.f32.mrf.mxu0
        %1202 = vmatprep.mubr.f32.mxu0 0.0
        %1203 = vmatmul.mubr.f32.gmra.mxu0 %v1029
        %v1204 = vpop.f32.mrf.mxu0
        %v1205 = vadd.f32 0.0, %v1204
        %v1206 = vpop.f32.mrf.mxu0
        %1207 = vmatprep.mubr.f32.mxu0 0.0
        %1208 = vmatmul.mubr.f32.gmra.mxu0 %v1032
        %v1209 = vpop.f32.mrf.mxu0
        %v1210 = vadd.f32 0.0, %v1209
        %v1211 = vpop.f32.mrf.mxu0
        %1212 = vmatprep.mubr.f32.mxu0 0.0
        %1213 = vmatmul.mubr.f32.gmra.mxu0 %v1035
        %v1214 = vpop.f32.mrf.mxu0
        %v1215 = vadd.f32 0.0, %v1214
        %v1216 = vpop.f32.mrf.mxu0
        %1217 = vmatprep.mubr.f32.mxu0 0.0
        %1218 = vmatmul.mubr.f32.gmra.mxu0 %v1038
        %v1219 = vpop.f32.mrf.mxu0
        %v1220 = vadd.f32 0.0, %v1219
        %v1221 = vpop.f32.mrf.mxu0
        %1222 = vmatprep.mubr.f32.mxu0 0.0
        %1223 = vmatmul.mubr.f32.gmra.mxu0 %v1041
        %v1224 = vpop.f32.mrf.mxu0
        %v1225 = vadd.f32 0.0, %v1224
        %v1226 = vpop.f32.mrf.mxu0
        %1227 = vmatprep.mubr.f32.mxu0 0.0
        %1228 = vmatmul.mubr.f32.gmra.mxu0 %v1044
        %v1229 = vpop.f32.mrf.mxu0
        %v1230 = vadd.f32 0.0, %v1229
        %v1231 = vpop.f32.mrf.mxu0
        %1232 = vmatprep.mubr.f32.mxu0 0.0
        %1233 = vmatmul.mubr.f32.gmra.mxu0 %v1047
        %v1234 = vpop.f32.mrf.mxu0
        %v1235 = vadd.f32 0.0, %v1234
        %v1236 = vpop.f32.mrf.mxu0
        %1237 = vmatprep.mubr.f32.mxu0 0.0
        %1238 = vmatmul.mubr.f32.gmra.mxu0 %v1050
        %v1239 = vpop.f32.mrf.mxu0
        %v1240 = vadd.f32 0.0, %v1239
        %v1241 = vpop.f32.mrf.mxu0
        %1242 = vmatprep.mubr.f32.mxu0 0.0
        %1243 = vmatmul.mubr.f32.gmra.mxu0 %v1053
        %v1244 = vpop.f32.mrf.mxu0
        %v1245 = vadd.f32 0.0, %v1244
        %v1246 = vpop.f32.mrf.mxu0
        %1247 = vmatprep.mubr.f32.mxu0 0.0
        %1248 = vmatmul.mubr.f32.gmra.mxu0 %v1056
        %v1249 = vpop.f32.mrf.mxu0
        %v1250 = vadd.f32 0.0, %v1249
        %v1251 = vpop.f32.mrf.mxu0
        %1252 = vmatprep.mubr.f32.mxu0 0.0
        %1253 = vmatmul.mubr.f32.gmra.mxu0 %v1059
        %v1254 = vpop.f32.mrf.mxu0
        %v1255 = vadd.f32 0.0, %v1254
        %v1256 = vpop.f32.mrf.mxu0
        %1257 = vmatprep.mubr.f32.mxu0 0.0
        %1258 = vmatmul.mubr.f32.gmra.mxu0 %v1062
        %v1259 = vpop.f32.mrf.mxu0
        %v1260 = vadd.f32 0.0, %v1259
        %v1261 = vpop.f32.mrf.mxu0
        %1262 = vmatprep.mubr.f32.mxu0 0.0
        %1263 = vmatmul.mubr.f32.gmra.mxu0 %v1065
        %v1264 = vpop.f32.mrf.mxu0
        %v1265 = vadd.f32 0.0, %v1264
        %v1266 = vpop.f32.mrf.mxu0
        %1267 = vmatprep.mubr.f32.mxu0 0.0
        %1268 = vmatmul.mubr.f32.gmra.mxu0 %v1068
        %v1269 = vpop.f32.mrf.mxu0
        %v1270 = vadd.f32 0.0, %v1269
        %v1271 = vpop.f32.mrf.mxu0
        %1272 = vmatprep.mubr.f32.mxu0 0.0
        %1273 = vmatmul.mubr.f32.gmra.mxu0 %v1071
        %v1274 = vpop.f32.mrf.mxu0
        %v1275 = vadd.f32 0.0, %v1274
        %v1276 = vpop.f32.mrf.mxu0
        %1277 = vmatprep.mubr.f32.mxu0 0.0
        %1278 = vmatmul.mubr.f32.gmra.mxu0 %v1074
        %v1279 = vpop.f32.mrf.mxu0
        %v1280 = vadd.f32 0.0, %v1279
        %v1281 = vpop.f32.mrf.mxu0
        %1282 = vmatprep.mubr.f32.mxu0 0.0
        %1283 = vmatmul.mubr.f32.gmra.mxu0 %v1077
        %v1284 = vpop.f32.mrf.mxu0
        %v1285 = vadd.f32 0.0, %v1284
        %v1286 = vpop.f32.mrf.mxu0
        %1287 = vmatprep.mubr.f32.mxu0 0.0
        %1288 = vmatmul.mubr.f32.gmra.mxu0 %v1080
        %v1289 = vpop.f32.mrf.mxu0
        %v1290 = vadd.f32 0.0, %v1289
        %v1291 = vpop.f32.mrf.mxu0
        %1292 = vmatprep.mubr.f32.mxu0 0.0
        %1293 = vmatmul.mubr.f32.gmra.mxu0 %v1083
        %v1294 = vpop.f32.mrf.mxu0
        %v1295 = vadd.f32 0.0, %v1294
        %v1296 = vpop.f32.mrf.mxu0
        %1297 = vmatprep.mubr.f32.mxu0 0.0
        %1298 = vmatmul.mubr.f32.gmra.mxu0 %v1086
        %v1299 = vpop.f32.mrf.mxu0
        %v1300 = vadd.f32 0.0, %v1299
        %v1301 = vpop.f32.mrf.mxu0
        %1302 = vmatprep.mubr.f32.mxu0 0.0
        %1303 = vmatmul.mubr.f32.gmra.mxu0 %v1089
        %v1304 = vpop.f32.mrf.mxu0
        %v1305 = vadd.f32 0.0, %v1304
        %v1306 = vpop.f32.mrf.mxu0
        %1307 = vmatprep.mubr.f32.mxu0 0.0
        %1308 = vmatmul.mubr.f32.gmra.mxu0 %v1092
        %v1309 = vpop.f32.mrf.mxu0
        %v1310 = vadd.f32 0.0, %v1309
        %v1311 = vpop.f32.mrf.mxu0
        %1312 = vmatprep.mubr.f32.mxu0 0.0
        %1313 = vmatmul.mubr.f32.gmra.mxu0 %v1095
        %v1314 = vpop.f32.mrf.mxu0
        %v1315 = vadd.f32 0.0, %v1314
        %v1316 = vpop.f32.mrf.mxu0
        %1317 = vmatprep.mubr.f32.mxu0 0.0
        %1318 = vmatmul.mubr.f32.gmra.mxu0 %v1098
        %v1319 = vpop.f32.mrf.mxu0
        %v1320 = vadd.f32 0.0, %v1319
        %v1321 = vpop.f32.mrf.mxu0
        %1322 = vmatprep.mubr.f32.mxu0 0.0
        %1323 = vmatmul.mubr.f32.gmra.mxu0 %v1101
        %v1324 = vpop.f32.mrf.mxu0
        %v1325 = vadd.f32 0.0, %v1324
        %v1326 = vpop.f32.mrf.mxu0
        %1327 = vmatprep.mubr.f32.mxu0 0.0
        %1328 = vmatmul.mubr.f32.gmra.mxu0 %v1104
        %v1329 = vpop.f32.mrf.mxu0
        %v1330 = vadd.f32 0.0, %v1329
        %v1331 = vpop.f32.mrf.mxu0
        %1332 = vmatprep.mubr.f32.mxu0 0.0
        %1333 = vmatmul.mubr.f32.gmra.mxu0 %v1107
        %v1334 = vpop.f32.mrf.mxu0
        %v1335 = vadd.f32 0.0, %v1334
        %v1336 = vpop.f32.mrf.mxu0
        %1337 = vdwg.mxu0
        %v1338 = vsub.f32 %v491, %v1180
        %v1339 = vsub.f32 %v496, %v1185
        %v1340 = vsub.f32 %v501, %v1190
        %v1341 = vsub.f32 %v506, %v1195
        %v1342 = vsub.f32 %v511, %v1200
        %v1343 = vsub.f32 %v516, %v1205
        %v1344 = vsub.f32 %v521, %v1210
        %v1345 = vsub.f32 %v526, %v1215
        %v1346 = vsub.f32 %v531, %v1220
        %v1347 = vsub.f32 %v536, %v1225
        %v1348 = vsub.f32 %v541, %v1230
        %v1349 = vsub.f32 %v546, %v1235
        %v1350 = vsub.f32 %v551, %v1240
        %v1351 = vsub.f32 %v556, %v1245
        %v1352 = vsub.f32 %v561, %v1250
        %v1353 = vsub.f32 %v566, %v1255
        %v1354 = vsub.f32 %v571, %v1260
        %v1355 = vsub.f32 %v576, %v1265
        %v1356 = vsub.f32 %v581, %v1270
        %v1357 = vsub.f32 %v586, %v1275
        %v1358 = vsub.f32 %v591, %v1280
        %v1359 = vsub.f32 %v596, %v1285
        %v1360 = vsub.f32 %v601, %v1290
        %v1361 = vsub.f32 %v606, %v1295
        %v1362 = vsub.f32 %v611, %v1300
        %v1363 = vsub.f32 %v616, %v1305
        %v1364 = vsub.f32 %v621, %v1310
        %v1365 = vsub.f32 %v626, %v1315
        %v1366 = vsub.f32 %v631, %v1320
        %v1367 = vsub.f32 %v636, %v1325
        %v1368 = vsub.f32 %v641, %v1330
        %v1369 = vsub.f32 %v646, %v1335
        %v1370 = vmul.f32 %v1338, %v1338
        %v1371 = vmul.f32 %v1339, %v1339
        %v1372 = vmul.f32 %v1340, %v1340
        %v1373 = vmul.f32 %v1341, %v1341
        %v1374 = vmul.f32 %v1342, %v1342
        %v1375 = vmul.f32 %v1343, %v1343
        %v1376 = vmul.f32 %v1344, %v1344
        %v1377 = vmul.f32 %v1345, %v1345
        %v1378 = vmul.f32 %v1346, %v1346
        %v1379 = vmul.f32 %v1347, %v1347
        %v1380 = vmul.f32 %v1348, %v1348
        %v1381 = vmul.f32 %v1349, %v1349
        %v1382 = vmul.f32 %v1350, %v1350
        %v1383 = vmul.f32 %v1351, %v1351
        %v1384 = vmul.f32 %v1352, %v1352
        %v1385 = vmul.f32 %v1353, %v1353
        %v1386 = vmul.f32 %v1354, %v1354
        %v1387 = vmul.f32 %v1355, %v1355
        %v1388 = vmul.f32 %v1356, %v1356
        %v1389 = vmul.f32 %v1357, %v1357
        %v1390 = vmul.f32 %v1358, %v1358
        %v1391 = vmul.f32 %v1359, %v1359
        %v1392 = vmul.f32 %v1360, %v1360
        %v1393 = vmul.f32 %v1361, %v1361
        %v1394 = vmul.f32 %v1362, %v1362
        %v1395 = vmul.f32 %v1363, %v1363
        %v1396 = vmul.f32 %v1364, %v1364
        %v1397 = vmul.f32 %v1365, %v1365
        %v1398 = vmul.f32 %v1366, %v1366
        %v1399 = vmul.f32 %v1367, %v1367
        %v1400 = vmul.f32 %v1368, %v1368
        %v1401 = vmul.f32 %v1369, %v1369
        %v1403 = vsel %vm657, %v1370, 0
        %v1406 = vsel %vm657, %v1371, 0
        %v1409 = vsel %vm657, %v1372, 0
        %v1412 = vsel %vm657, %v1373, 0
        %v1415 = vsel %vm657, %v1374, 0
        %v1418 = vsel %vm657, %v1375, 0
        %v1421 = vsel %vm657, %v1376, 0
        %v1424 = vsel %vm657, %v1377, 0
        %v1427 = vsel %vm657, %v1378, 0
        %v1430 = vsel %vm657, %v1379, 0
        %v1433 = vsel %vm657, %v1380, 0
        %v1436 = vsel %vm657, %v1381, 0
        %v1439 = vsel %vm657, %v1382, 0
        %v1442 = vsel %vm657, %v1383, 0
        %v1445 = vsel %vm657, %v1384, 0
        %v1448 = vsel %vm657, %v1385, 0
        %v1451 = vsel %vm657, %v1386, 0
        %v1454 = vsel %vm657, %v1387, 0
        %v1457 = vsel %vm657, %v1388, 0
        %v1460 = vsel %vm657, %v1389, 0
        %v1463 = vsel %vm657, %v1390, 0
        %v1466 = vsel %vm657, %v1391, 0
        %v1469 = vsel %vm657, %v1392, 0
        %v1472 = vsel %vm657, %v1393, 0
        %v1475 = vsel %vm657, %v1394, 0
        %v1478 = vsel %vm657, %v1395, 0
        %v1481 = vsel %vm657, %v1396, 0
        %v1484 = vsel %vm657, %v1397, 0
        %v1487 = vsel %vm657, %v1398, 0
        %v1490 = vsel %vm657, %v1399, 0
        %v1493 = vsel %vm657, %v1400, 0
        %v1496 = vsel %vm657, %v1401, 0
        %1498 = vmatprep.subr.mxu0 0.0
        %1499 = vmatpush1.msra.mxu0 0.0
        %1500 = vmatprep.subr.mxu0 0.0
        %1501 = vmatpush1.msra.mxu0 0.0
        %1502 = vmatprep.subr.mxu0 0.0
        %1503 = vmatpush1.msra.mxu0 0.0
        %1504 = vmatprep.subr.mxu0 0.0
        %1505 = vmatpush1.msra.mxu0 0.0
        %1506 = vmatprep.subr.mxu0 0.0
        %1507 = vmatpush1.msra.mxu0 0.0
        %1508 = vmatprep.subr.mxu0 0.0
        %1509 = vmatpush1.msra.mxu0 0.0
        %1510 = vmatprep.subr.mxu0 0.0
        %1511 = vmatpush1.msra.mxu0 0.0
        %1512 = vmatprep.subr.mxu0 0.0
        %1513 = vmatpush1.msra.mxu0 0.0
        %1514 = vmatprep.subr.mxu0 0.0
        %1515 = vmatpush1.msra.mxu0 %v656
        %1516 = vmatprep.subr.mxu0 0.0
        %1517 = vmatpush1.msra.mxu0 %v655
        %1518 = vmatprep.subr.mxu0 0.0
        %1519 = vmatpush1.msra.mxu0 %v654
        %1520 = vmatprep.subr.mxu0 0.0
        %1521 = vmatpush1.msra.mxu0 %v653
        %1522 = vmatprep.subr.mxu0 0.0
        %1523 = vmatpush1.msra.mxu0 %v652
        %1524 = vmatprep.subr.mxu0 0.0
        %1525 = vmatpush1.msra.mxu0 %v651
        %1526 = vmatprep.subr.mxu0 0.0
        %1527 = vmatpush1.msra.mxu0 %v650
        %1528 = vmatprep.subr.mxu0 0.0
        %1529 = vmatpush1.msra.mxu0 %v649
        %1530 = vmatprep.subr.mxu0 0.0
        %1531 = vmatpush2.msra.mxu0 0.0
        %1532 = vmatprep.subr.mxu0 0.0
        %1533 = vmatpush2.msra.mxu0 0.0
        %1534 = vmatprep.subr.mxu0 0.0
        %1535 = vmatpush2.msra.mxu0 0.0
        %1536 = vmatprep.subr.mxu0 0.0
        %1537 = vmatpush2.msra.mxu0 0.0
        %1538 = vmatprep.subr.mxu0 0.0
        %1539 = vmatpush2.msra.mxu0 0.0
        %1540 = vmatprep.subr.mxu0 0.0
        %1541 = vmatpush2.msra.mxu0 0.0
        %1542 = vmatprep.subr.mxu0 0.0
        %1543 = vmatpush2.msra.mxu0 0.0
        %1544 = vmatprep.subr.mxu0 0.0
        %1545 = vmatpush2.msra.mxu0 0.0
        %1546 = vmatprep.subr.mxu0 0.0
        %1547 = vmatpush2.msra.mxu0 0.0
        %1548 = vmatprep.subr.mxu0 0.0
        %1549 = vmatpush2.msra.mxu0 0.0
        %1550 = vmatprep.subr.mxu0 0.0
        %1551 = vmatpush2.msra.mxu0 0.0
        %1552 = vmatprep.subr.mxu0 0.0
        %1553 = vmatpush2.msra.mxu0 0.0
        %1554 = vmatprep.subr.mxu0 0.0
        %1555 = vmatpush2.msra.mxu0 0.0
        %1556 = vmatprep.subr.mxu0 0.0
        %1557 = vmatpush2.msra.mxu0 0.0
        %1558 = vmatprep.subr.mxu0 0.0
        %1559 = vmatpush2.msra.mxu0 0.0
        %1560 = vmatprep.subr.mxu0 0.0
        %1561 = vmatpush2.msra.mxu0 0.0
        %1562 = vmatprep.mubr.f32.mxu0 0.0
        %1563 = vmatmul.mubr.f32.gmra.mxu0 %v1403
        %v1564 = vpop.f32.mrf.mxu0
        %v1565 = vadd.f32 0.0, %v1564
        %v1566 = vpop.f32.mrf.mxu0
        %1567 = vmatprep.mubr.f32.mxu0 0.0
        %1568 = vmatmul.mubr.f32.gmra.mxu0 %v1406
        %v1569 = vpop.f32.mrf.mxu0
        %v1570 = vadd.f32 0.0, %v1569
        %v1571 = vpop.f32.mrf.mxu0
        %1572 = vmatprep.mubr.f32.mxu0 0.0
        %1573 = vmatmul.mubr.f32.gmra.mxu0 %v1409
        %v1574 = vpop.f32.mrf.mxu0
        %v1575 = vadd.f32 0.0, %v1574
        %v1576 = vpop.f32.mrf.mxu0
        %1577 = vmatprep.mubr.f32.mxu0 0.0
        %1578 = vmatmul.mubr.f32.gmra.mxu0 %v1412
        %v1579 = vpop.f32.mrf.mxu0
        %v1580 = vadd.f32 0.0, %v1579
        %v1581 = vpop.f32.mrf.mxu0
        %1582 = vmatprep.mubr.f32.mxu0 0.0
        %1583 = vmatmul.mubr.f32.gmra.mxu0 %v1415
        %v1584 = vpop.f32.mrf.mxu0
        %v1585 = vadd.f32 0.0, %v1584
        %v1586 = vpop.f32.mrf.mxu0
        %1587 = vmatprep.mubr.f32.mxu0 0.0
        %1588 = vmatmul.mubr.f32.gmra.mxu0 %v1418
        %v1589 = vpop.f32.mrf.mxu0
        %v1590 = vadd.f32 0.0, %v1589
        %v1591 = vpop.f32.mrf.mxu0
        %1592 = vmatprep.mubr.f32.mxu0 0.0
        %1593 = vmatmul.mubr.f32.gmra.mxu0 %v1421
        %v1594 = vpop.f32.mrf.mxu0
        %v1595 = vadd.f32 0.0, %v1594
        %v1596 = vpop.f32.mrf.mxu0
        %1597 = vmatprep.mubr.f32.mxu0 0.0
        %1598 = vmatmul.mubr.f32.gmra.mxu0 %v1424
        %v1599 = vpop.f32.mrf.mxu0
        %v1600 = vadd.f32 0.0, %v1599
        %v1601 = vpop.f32.mrf.mxu0
        %1602 = vmatprep.mubr.f32.mxu0 0.0
        %1603 = vmatmul.mubr.f32.gmra.mxu0 %v1427
        %v1604 = vpop.f32.mrf.mxu0
        %v1605 = vadd.f32 0.0, %v1604
        %v1606 = vpop.f32.mrf.mxu0
        %1607 = vmatprep.mubr.f32.mxu0 0.0
        %1608 = vmatmul.mubr.f32.gmra.mxu0 %v1430
        %v1609 = vpop.f32.mrf.mxu0
        %v1610 = vadd.f32 0.0, %v1609
        %v1611 = vpop.f32.mrf.mxu0
        %1612 = vmatprep.mubr.f32.mxu0 0.0
        %1613 = vmatmul.mubr.f32.gmra.mxu0 %v1433
        %v1614 = vpop.f32.mrf.mxu0
        %v1615 = vadd.f32 0.0, %v1614
        %v1616 = vpop.f32.mrf.mxu0
        %1617 = vmatprep.mubr.f32.mxu0 0.0
        %1618 = vmatmul.mubr.f32.gmra.mxu0 %v1436
        %v1619 = vpop.f32.mrf.mxu0
        %v1620 = vadd.f32 0.0, %v1619
        %v1621 = vpop.f32.mrf.mxu0
        %1622 = vmatprep.mubr.f32.mxu0 0.0
        %1623 = vmatmul.mubr.f32.gmra.mxu0 %v1439
        %v1624 = vpop.f32.mrf.mxu0
        %v1625 = vadd.f32 0.0, %v1624
        %v1626 = vpop.f32.mrf.mxu0
        %1627 = vmatprep.mubr.f32.mxu0 0.0
        %1628 = vmatmul.mubr.f32.gmra.mxu0 %v1442
        %v1629 = vpop.f32.mrf.mxu0
        %v1630 = vadd.f32 0.0, %v1629
        %v1631 = vpop.f32.mrf.mxu0
        %1632 = vmatprep.mubr.f32.mxu0 0.0
        %1633 = vmatmul.mubr.f32.gmra.mxu0 %v1445
        %v1634 = vpop.f32.mrf.mxu0
        %v1635 = vadd.f32 0.0, %v1634
        %v1636 = vpop.f32.mrf.mxu0
        %1637 = vmatprep.mubr.f32.mxu0 0.0
        %1638 = vmatmul.mubr.f32.gmra.mxu0 %v1448
        %v1639 = vpop.f32.mrf.mxu0
        %v1640 = vadd.f32 0.0, %v1639
        %v1641 = vpop.f32.mrf.mxu0
        %1642 = vmatprep.mubr.f32.mxu0 0.0
        %1643 = vmatmul.mubr.f32.gmra.mxu0 %v1451
        %v1644 = vpop.f32.mrf.mxu0
        %v1645 = vadd.f32 0.0, %v1644
        %v1646 = vpop.f32.mrf.mxu0
        %1647 = vmatprep.mubr.f32.mxu0 0.0
        %1648 = vmatmul.mubr.f32.gmra.mxu0 %v1454
        %v1649 = vpop.f32.mrf.mxu0
        %v1650 = vadd.f32 0.0, %v1649
        %v1651 = vpop.f32.mrf.mxu0
        %1652 = vmatprep.mubr.f32.mxu0 0.0
        %1653 = vmatmul.mubr.f32.gmra.mxu0 %v1457
        %v1654 = vpop.f32.mrf.mxu0
        %v1655 = vadd.f32 0.0, %v1654
        %v1656 = vpop.f32.mrf.mxu0
        %1657 = vmatprep.mubr.f32.mxu0 0.0
        %1658 = vmatmul.mubr.f32.gmra.mxu0 %v1460
        %v1659 = vpop.f32.mrf.mxu0
        %v1660 = vadd.f32 0.0, %v1659
        %v1661 = vpop.f32.mrf.mxu0
        %1662 = vmatprep.mubr.f32.mxu0 0.0
        %1663 = vmatmul.mubr.f32.gmra.mxu0 %v1463
        %v1664 = vpop.f32.mrf.mxu0
        %v1665 = vadd.f32 0.0, %v1664
        %v1666 = vpop.f32.mrf.mxu0
        %1667 = vmatprep.mubr.f32.mxu0 0.0
        %1668 = vmatmul.mubr.f32.gmra.mxu0 %v1466
        %v1669 = vpop.f32.mrf.mxu0
        %v1670 = vadd.f32 0.0, %v1669
        %v1671 = vpop.f32.mrf.mxu0
        %1672 = vmatprep.mubr.f32.mxu0 0.0
        %1673 = vmatmul.mubr.f32.gmra.mxu0 %v1469
        %v1674 = vpop.f32.mrf.mxu0
        %v1675 = vadd.f32 0.0, %v1674
        %v1676 = vpop.f32.mrf.mxu0
        %1677 = vmatprep.mubr.f32.mxu0 0.0
        %1678 = vmatmul.mubr.f32.gmra.mxu0 %v1472
        %v1679 = vpop.f32.mrf.mxu0
        %v1680 = vadd.f32 0.0, %v1679
        %v1681 = vpop.f32.mrf.mxu0
        %1682 = vmatprep.mubr.f32.mxu0 0.0
        %1683 = vmatmul.mubr.f32.gmra.mxu0 %v1475
        %v1684 = vpop.f32.mrf.mxu0
        %v1685 = vadd.f32 0.0, %v1684
        %v1686 = vpop.f32.mrf.mxu0
        %1687 = vmatprep.mubr.f32.mxu0 0.0
        %1688 = vmatmul.mubr.f32.gmra.mxu0 %v1478
        %v1689 = vpop.f32.mrf.mxu0
        %v1690 = vadd.f32 0.0, %v1689
        %v1691 = vpop.f32.mrf.mxu0
        %1692 = vmatprep.mubr.f32.mxu0 0.0
        %1693 = vmatmul.mubr.f32.gmra.mxu0 %v1481
        %v1694 = vpop.f32.mrf.mxu0
        %v1695 = vadd.f32 0.0, %v1694
        %v1696 = vpop.f32.mrf.mxu0
        %1697 = vmatprep.mubr.f32.mxu0 0.0
        %1698 = vmatmul.mubr.f32.gmra.mxu0 %v1484
        %v1699 = vpop.f32.mrf.mxu0
        %v1700 = vadd.f32 0.0, %v1699
        %v1701 = vpop.f32.mrf.mxu0
        %1702 = vmatprep.mubr.f32.mxu0 0.0
        %1703 = vmatmul.mubr.f32.gmra.mxu0 %v1487
        %v1704 = vpop.f32.mrf.mxu0
        %v1705 = vadd.f32 0.0, %v1704
        %v1706 = vpop.f32.mrf.mxu0
        %1707 = vmatprep.mubr.f32.mxu0 0.0
        %1708 = vmatmul.mubr.f32.gmra.mxu0 %v1490
        %v1709 = vpop.f32.mrf.mxu0
        %v1710 = vadd.f32 0.0, %v1709
        %v1711 = vpop.f32.mrf.mxu0
        %1712 = vmatprep.mubr.f32.mxu0 0.0
        %1713 = vmatmul.mubr.f32.gmra.mxu0 %v1493
        %v1714 = vpop.f32.mrf.mxu0
        %v1715 = vadd.f32 0.0, %v1714
        %v1716 = vpop.f32.mrf.mxu0
        %1717 = vmatprep.mubr.f32.mxu0 0.0
        %1718 = vmatmul.mubr.f32.gmra.mxu0 %v1496
        %v1719 = vpop.f32.mrf.mxu0
        %v1720 = vadd.f32 0.0, %v1719
        %v1721 = vpop.f32.mrf.mxu0
        %1722 = vdwg.mxu0
        %v1723 = vmul.f32 %v1565, 0.0625
        %v1724 = vmul.f32 %v1570, 0.0625
        %v1725 = vmul.f32 %v1575, 0.0625
        %v1726 = vmul.f32 %v1580, 0.0625
        %v1727 = vmul.f32 %v1585, 0.0625
        %v1728 = vmul.f32 %v1590, 0.0625
        %v1729 = vmul.f32 %v1595, 0.0625
        %v1730 = vmul.f32 %v1600, 0.0625
        %v1731 = vmul.f32 %v1605, 0.0625
        %v1732 = vmul.f32 %v1610, 0.0625
        %v1733 = vmul.f32 %v1615, 0.0625
        %v1734 = vmul.f32 %v1620, 0.0625
        %v1735 = vmul.f32 %v1625, 0.0625
        %v1736 = vmul.f32 %v1630, 0.0625
        %v1737 = vmul.f32 %v1635, 0.0625
        %v1738 = vmul.f32 %v1640, 0.0625
        %v1739 = vmul.f32 %v1645, 0.0625
        %v1740 = vmul.f32 %v1650, 0.0625
        %v1741 = vmul.f32 %v1655, 0.0625
        %v1742 = vmul.f32 %v1660, 0.0625
        %v1743 = vmul.f32 %v1665, 0.0625
        %v1744 = vmul.f32 %v1670, 0.0625
        %v1745 = vmul.f32 %v1675, 0.0625
        %v1746 = vmul.f32 %v1680, 0.0625
        %v1747 = vmul.f32 %v1685, 0.0625
        %v1748 = vmul.f32 %v1690, 0.0625
        %v1749 = vmul.f32 %v1695, 0.0625
        %v1750 = vmul.f32 %v1700, 0.0625
        %v1751 = vmul.f32 %v1705, 0.0625
        %v1752 = vmul.f32 %v1710, 0.0625
        %v1753 = vmul.f32 %v1715, 0.0625
        %v1754 = vmul.f32 %v1720, 0.0625
        %v1755 = vadd.f32 %v1723, 1e-05
        %v1756 = vadd.f32 %v1724, 1e-05
        %v1757 = vadd.f32 %v1725, 1e-05
        %v1758 = vadd.f32 %v1726, 1e-05
        %v1759 = vadd.f32 %v1727, 1e-05
        %v1760 = vadd.f32 %v1728, 1e-05
        %v1761 = vadd.f32 %v1729, 1e-05
        %v1762 = vadd.f32 %v1730, 1e-05
        %v1763 = vadd.f32 %v1731, 1e-05
        %v1764 = vadd.f32 %v1732, 1e-05
        %v1765 = vadd.f32 %v1733, 1e-05
        %v1766 = vadd.f32 %v1734, 1e-05
        %v1767 = vadd.f32 %v1735, 1e-05
        %v1768 = vadd.f32 %v1736, 1e-05
        %v1769 = vadd.f32 %v1737, 1e-05
        %v1770 = vadd.f32 %v1738, 1e-05
        %v1771 = vadd.f32 %v1739, 1e-05
        %v1772 = vadd.f32 %v1740, 1e-05
        %v1773 = vadd.f32 %v1741, 1e-05
        %v1774 = vadd.f32 %v1742, 1e-05
        %v1775 = vadd.f32 %v1743, 1e-05
        %v1776 = vadd.f32 %v1744, 1e-05
        %v1777 = vadd.f32 %v1745, 1e-05
        %v1778 = vadd.f32 %v1746, 1e-05
        %v1779 = vadd.f32 %v1747, 1e-05
        %v1780 = vadd.f32 %v1748, 1e-05
        %v1781 = vadd.f32 %v1749, 1e-05
        %v1782 = vadd.f32 %v1750, 1e-05
        %v1783 = vadd.f32 %v1751, 1e-05
        %v1784 = vadd.f32 %v1752, 1e-05
        %v1785 = vadd.f32 %v1753, 1e-05
        %v1786 = vadd.f32 %v1754, 1e-05
        %v1787 = vrsqrt.pop %v1755
        %v1788 = vrsqrt.pop %v1756
        %v1789 = vrsqrt.pop %v1757
        %v1790 = vrsqrt.pop %v1758
        %v1791 = vrsqrt.pop %v1759
        %v1792 = vrsqrt.pop %v1760
        %v1793 = vrsqrt.pop %v1761
        %v1794 = vrsqrt.pop %v1762
        %v1795 = vrsqrt.pop %v1763
        %v1796 = vrsqrt.pop %v1764
        %v1797 = vrsqrt.pop %v1765
        %v1798 = vrsqrt.pop %v1766
        %v1799 = vrsqrt.pop %v1767
        %v1800 = vrsqrt.pop %v1768
        %v1801 = vrsqrt.pop %v1769
        %v1802 = vrsqrt.pop %v1770
        %v1803 = vrsqrt.pop %v1771
        %v1804 = vrsqrt.pop %v1772
        %v1805 = vrsqrt.pop %v1773
        %v1806 = vrsqrt.pop %v1774
        %v1807 = vrsqrt.pop %v1775
        %v1808 = vrsqrt.pop %v1776
        %v1809 = vrsqrt.pop %v1777
        %v1810 = vrsqrt.pop %v1778
        %v1811 = vrsqrt.pop %v1779
        %v1812 = vrsqrt.pop %v1780
        %v1813 = vrsqrt.pop %v1781
        %v1814 = vrsqrt.pop %v1782
        %v1815 = vrsqrt.pop %v1783
        %v1816 = vrsqrt.pop %v1784
        %v1817 = vrsqrt.pop %v1785
        %v1818 = vrsqrt.pop %v1786
        %v1820 = vsel %vm1012, %v1787, 0
        %v1823 = vsel %vm1012, %v1788, 0
        %v1826 = vsel %vm1012, %v1789, 0
        %v1829 = vsel %vm1012, %v1790, 0
        %v1832 = vsel %vm1012, %v1791, 0
        %v1835 = vsel %vm1012, %v1792, 0
        %v1838 = vsel %vm1012, %v1793, 0
        %v1841 = vsel %vm1012, %v1794, 0
        %v1844 = vsel %vm1012, %v1795, 0
        %v1847 = vsel %vm1012, %v1796, 0
        %v1850 = vsel %vm1012, %v1797, 0
        %v1853 = vsel %vm1012, %v1798, 0
        %v1856 = vsel %vm1012, %v1799, 0
        %v1859 = vsel %vm1012, %v1800, 0
        %v1862 = vsel %vm1012, %v1801, 0
        %v1865 = vsel %vm1012, %v1802, 0
        %v1868 = vsel %vm1012, %v1803, 0
        %v1871 = vsel %vm1012, %v1804, 0
        %v1874 = vsel %vm1012, %v1805, 0
        %v1877 = vsel %vm1012, %v1806, 0
        %v1880 = vsel %vm1012, %v1807, 0
        %v1883 = vsel %vm1012, %v1808, 0
        %v1886 = vsel %vm1012, %v1809, 0
        %v1889 = vsel %vm1012, %v1810, 0
        %v1892 = vsel %vm1012, %v1811, 0
        %v1895 = vsel %vm1012, %v1812, 0
        %v1898 = vsel %vm1012, %v1813, 0
        %v1901 = vsel %vm1012, %v1814, 0
        %v1904 = vsel %vm1012, %v1815, 0
        %v1907 = vsel %vm1012, %v1816, 0
        %v1910 = vsel %vm1012, %v1817, 0
        %v1913 = vsel %vm1012, %v1818, 0
        %1915 = vmatprep.subr.mxu0 0.0
        %1916 = vmatpush1.msra.mxu0 0.0
        %1917 = vmatprep.subr.mxu0 0.0
        %1918 = vmatpush1.msra.mxu0 0.0
        %1919 = vmatprep.subr.mxu0 0.0
        %1920 = vmatpush1.msra.mxu0 0.0
        %1921 = vmatprep.subr.mxu0 0.0
        %1922 = vmatpush1.msra.mxu0 0.0
        %1923 = vmatprep.subr.mxu0 0.0
        %1924 = vmatpush1.msra.mxu0 0.0
        %1925 = vmatprep.subr.mxu0 0.0
        %1926 = vmatpush1.msra.mxu0 0.0
        %1927 = vmatprep.subr.mxu0 0.0
        %1928 = vmatpush1.msra.mxu0 0.0
        %1929 = vmatprep.subr.mxu0 0.0
        %1930 = vmatpush1.msra.mxu0 0.0
        %1931 = vmatprep.subr.mxu0 0.0
        %1932 = vmatpush1.msra.mxu0 0.0
        %1933 = vmatprep.subr.mxu0 0.0
        %1934 = vmatpush1.msra.mxu0 0.0
        %1935 = vmatprep.subr.mxu0 0.0
        %1936 = vmatpush1.msra.mxu0 0.0
        %1937 = vmatprep.subr.mxu0 0.0
        %1938 = vmatpush1.msra.mxu0 0.0
        %1939 = vmatprep.subr.mxu0 0.0
        %1940 = vmatpush1.msra.mxu0 0.0
        %1941 = vmatprep.subr.mxu0 0.0
        %1942 = vmatpush1.msra.mxu0 0.0
        %1943 = vmatprep.subr.mxu0 0.0
        %1944 = vmatpush1.msra.mxu0 0.0
        %1945 = vmatprep.subr.mxu0 0.0
        %1946 = vmatpush1.msra.mxu0 %v1111
        %1947 = vmatprep.subr.mxu0 0.0
        %1948 = vmatpush2.msra.mxu0 0.0
        %1949 = vmatprep.subr.mxu0 0.0
        %1950 = vmatpush2.msra.mxu0 0.0
        %1951 = vmatprep.subr.mxu0 0.0
        %1952 = vmatpush2.msra.mxu0 0.0
        %1953 = vmatprep.subr.mxu0 0.0
        %1954 = vmatpush2.msra.mxu0 0.0
        %1955 = vmatprep.subr.mxu0 0.0
        %1956 = vmatpush2.msra.mxu0 0.0
        %1957 = vmatprep.subr.mxu0 0.0
        %1958 = vmatpush2.msra.mxu0 0.0
        %1959 = vmatprep.subr.mxu0 0.0
        %1960 = vmatpush2.msra.mxu0 0.0
        %1961 = vmatprep.subr.mxu0 0.0
        %1962 = vmatpush2.msra.mxu0 0.0
        %1963 = vmatprep.subr.mxu0 0.0
        %1964 = vmatpush2.msra.mxu0 0.0
        %1965 = vmatprep.subr.mxu0 0.0
        %1966 = vmatpush2.msra.mxu0 0.0
        %1967 = vmatprep.subr.mxu0 0.0
        %1968 = vmatpush2.msra.mxu0 0.0
        %1969 = vmatprep.subr.mxu0 0.0
        %1970 = vmatpush2.msra.mxu0 0.0
        %1971 = vmatprep.subr.mxu0 0.0
        %1972 = vmatpush2.msra.mxu0 0.0
        %1973 = vmatprep.subr.mxu0 0.0
        %1974 = vmatpush2.msra.mxu0 0.0
        %1975 = vmatprep.subr.mxu0 0.0
        %1976 = vmatpush2.msra.mxu0 0.0
        %1977 = vmatprep.subr.mxu0 0.0
        %1978 = vmatpush2.msra.mxu0 0.0
        %1979 = vmatprep.mubr.f32.mxu0 0.0
        %1980 = vmatmul.mubr.f32.gmra.mxu0 %v1820
        %v1981 = vpop.f32.mrf.mxu0
        %v1982 = vadd.f32 0.0, %v1981
        %v1983 = vpop.f32.mrf.mxu0
        %1984 = vmatprep.mubr.f32.mxu0 0.0
        %1985 = vmatmul.mubr.f32.gmra.mxu0 %v1823
        %v1986 = vpop.f32.mrf.mxu0
        %v1987 = vadd.f32 0.0, %v1986
        %v1988 = vpop.f32.mrf.mxu0
        %1989 = vmatprep.mubr.f32.mxu0 0.0
        %1990 = vmatmul.mubr.f32.gmra.mxu0 %v1826
        %v1991 = vpop.f32.mrf.mxu0
        %v1992 = vadd.f32 0.0, %v1991
        %v1993 = vpop.f32.mrf.mxu0
        %1994 = vmatprep.mubr.f32.mxu0 0.0
        %1995 = vmatmul.mubr.f32.gmra.mxu0 %v1829
        %v1996 = vpop.f32.mrf.mxu0
        %v1997 = vadd.f32 0.0, %v1996
        %v1998 = vpop.f32.mrf.mxu0
        %1999 = vmatprep.mubr.f32.mxu0 0.0
        %2000 = vmatmul.mubr.f32.gmra.mxu0 %v1832
        %v2001 = vpop.f32.mrf.mxu0
        %v2002 = vadd.f32 0.0, %v2001
        %v2003 = vpop.f32.mrf.mxu0
        %2004 = vmatprep.mubr.f32.mxu0 0.0
        %2005 = vmatmul.mubr.f32.gmra.mxu0 %v1835
        %v2006 = vpop.f32.mrf.mxu0
        %v2007 = vadd.f32 0.0, %v2006
        %v2008 = vpop.f32.mrf.mxu0
        %2009 = vmatprep.mubr.f32.mxu0 0.0
        %2010 = vmatmul.mubr.f32.gmra.mxu0 %v1838
        %v2011 = vpop.f32.mrf.mxu0
        %v2012 = vadd.f32 0.0, %v2011
        %v2013 = vpop.f32.mrf.mxu0
        %2014 = vmatprep.mubr.f32.mxu0 0.0
        %2015 = vmatmul.mubr.f32.gmra.mxu0 %v1841
        %v2016 = vpop.f32.mrf.mxu0
        %v2017 = vadd.f32 0.0, %v2016
        %v2018 = vpop.f32.mrf.mxu0
        %2019 = vmatprep.mubr.f32.mxu0 0.0
        %2020 = vmatmul.mubr.f32.gmra.mxu0 %v1844
        %v2021 = vpop.f32.mrf.mxu0
        %v2022 = vadd.f32 0.0, %v2021
        %v2023 = vpop.f32.mrf.mxu0
        %2024 = vmatprep.mubr.f32.mxu0 0.0
        %2025 = vmatmul.mubr.f32.gmra.mxu0 %v1847
        %v2026 = vpop.f32.mrf.mxu0
        %v2027 = vadd.f32 0.0, %v2026
        %v2028 = vpop.f32.mrf.mxu0
        %2029 = vmatprep.mubr.f32.mxu0 0.0
        %2030 = vmatmul.mubr.f32.gmra.mxu0 %v1850
        %v2031 = vpop.f32.mrf.mxu0
        %v2032 = vadd.f32 0.0, %v2031
        %v2033 = vpop.f32.mrf.mxu0
        %2034 = vmatprep.mubr.f32.mxu0 0.0
        %2035 = vmatmul.mubr.f32.gmra.mxu0 %v1853
        %v2036 = vpop.f32.mrf.mxu0
        %v2037 = vadd.f32 0.0, %v2036
        %v2038 = vpop.f32.mrf.mxu0
        %2039 = vmatprep.mubr.f32.mxu0 0.0
        %2040 = vmatmul.mubr.f32.gmra.mxu0 %v1856
        %v2041 = vpop.f32.mrf.mxu0
        %v2042 = vadd.f32 0.0, %v2041
        %v2043 = vpop.f32.mrf.mxu0
        %2044 = vmatprep.mubr.f32.mxu0 0.0
        %2045 = vmatmul.mubr.f32.gmra.mxu0 %v1859
        %v2046 = vpop.f32.mrf.mxu0
        %v2047 = vadd.f32 0.0, %v2046
        %v2048 = vpop.f32.mrf.mxu0
        %2049 = vmatprep.mubr.f32.mxu0 0.0
        %2050 = vmatmul.mubr.f32.gmra.mxu0 %v1862
        %v2051 = vpop.f32.mrf.mxu0
        %v2052 = vadd.f32 0.0, %v2051
        %v2053 = vpop.f32.mrf.mxu0
        %2054 = vmatprep.mubr.f32.mxu0 0.0
        %2055 = vmatmul.mubr.f32.gmra.mxu0 %v1865
        %v2056 = vpop.f32.mrf.mxu0
        %v2057 = vadd.f32 0.0, %v2056
        %v2058 = vpop.f32.mrf.mxu0
        %2059 = vmatprep.mubr.f32.mxu0 0.0
        %2060 = vmatmul.mubr.f32.gmra.mxu0 %v1868
        %v2061 = vpop.f32.mrf.mxu0
        %v2062 = vadd.f32 0.0, %v2061
        %v2063 = vpop.f32.mrf.mxu0
        %2064 = vmatprep.mubr.f32.mxu0 0.0
        %2065 = vmatmul.mubr.f32.gmra.mxu0 %v1871
        %v2066 = vpop.f32.mrf.mxu0
        %v2067 = vadd.f32 0.0, %v2066
        %v2068 = vpop.f32.mrf.mxu0
        %2069 = vmatprep.mubr.f32.mxu0 0.0
        %2070 = vmatmul.mubr.f32.gmra.mxu0 %v1874
        %v2071 = vpop.f32.mrf.mxu0
        %v2072 = vadd.f32 0.0, %v2071
        %v2073 = vpop.f32.mrf.mxu0
        %2074 = vmatprep.mubr.f32.mxu0 0.0
        %2075 = vmatmul.mubr.f32.gmra.mxu0 %v1877
        %v2076 = vpop.f32.mrf.mxu0
        %v2077 = vadd.f32 0.0, %v2076
        %v2078 = vpop.f32.mrf.mxu0
        %2079 = vmatprep.mubr.f32.mxu0 0.0
        %2080 = vmatmul.mubr.f32.gmra.mxu0 %v1880
        %v2081 = vpop.f32.mrf.mxu0
        %v2082 = vadd.f32 0.0, %v2081
        %v2083 = vpop.f32.mrf.mxu0
        %2084 = vmatprep.mubr.f32.mxu0 0.0
        %2085 = vmatmul.mubr.f32.gmra.mxu0 %v1883
        %v2086 = vpop.f32.mrf.mxu0
        %v2087 = vadd.f32 0.0, %v2086
        %v2088 = vpop.f32.mrf.mxu0
        %2089 = vmatprep.mubr.f32.mxu0 0.0
        %2090 = vmatmul.mubr.f32.gmra.mxu0 %v1886
        %v2091 = vpop.f32.mrf.mxu0
        %v2092 = vadd.f32 0.0, %v2091
        %v2093 = vpop.f32.mrf.mxu0
        %2094 = vmatprep.mubr.f32.mxu0 0.0
        %2095 = vmatmul.mubr.f32.gmra.mxu0 %v1889
        %v2096 = vpop.f32.mrf.mxu0
        %v2097 = vadd.f32 0.0, %v2096
        %v2098 = vpop.f32.mrf.mxu0
        %2099 = vmatprep.mubr.f32.mxu0 0.0
        %2100 = vmatmul.mubr.f32.gmra.mxu0 %v1892
        %v2101 = vpop.f32.mrf.mxu0
        %v2102 = vadd.f32 0.0, %v2101
        %v2103 = vpop.f32.mrf.mxu0
        %2104 = vmatprep.mubr.f32.mxu0 0.0
        %2105 = vmatmul.mubr.f32.gmra.mxu0 %v1895
        %v2106 = vpop.f32.mrf.mxu0
        %v2107 = vadd.f32 0.0, %v2106
        %v2108 = vpop.f32.mrf.mxu0
        %2109 = vmatprep.mubr.f32.mxu0 0.0
        %2110 = vmatmul.mubr.f32.gmra.mxu0 %v1898
        %v2111 = vpop.f32.mrf.mxu0
        %v2112 = vadd.f32 0.0, %v2111
        %v2113 = vpop.f32.mrf.mxu0
        %2114 = vmatprep.mubr.f32.mxu0 0.0
        %2115 = vmatmul.mubr.f32.gmra.mxu0 %v1901
        %v2116 = vpop.f32.mrf.mxu0
        %v2117 = vadd.f32 0.0, %v2116
        %v2118 = vpop.f32.mrf.mxu0
        %2119 = vmatprep.mubr.f32.mxu0 0.0
        %2120 = vmatmul.mubr.f32.gmra.mxu0 %v1904
        %v2121 = vpop.f32.mrf.mxu0
        %v2122 = vadd.f32 0.0, %v2121
        %v2123 = vpop.f32.mrf.mxu0
        %2124 = vmatprep.mubr.f32.mxu0 0.0
        %2125 = vmatmul.mubr.f32.gmra.mxu0 %v1907
        %v2126 = vpop.f32.mrf.mxu0
        %v2127 = vadd.f32 0.0, %v2126
        %v2128 = vpop.f32.mrf.mxu0
        %2129 = vmatprep.mubr.f32.mxu0 0.0
        %2130 = vmatmul.mubr.f32.gmra.mxu0 %v1910
        %v2131 = vpop.f32.mrf.mxu0
        %v2132 = vadd.f32 0.0, %v2131
        %v2133 = vpop.f32.mrf.mxu0
        %2134 = vmatprep.mubr.f32.mxu0 0.0
        %2135 = vmatmul.mubr.f32.gmra.mxu0 %v1913
        %v2136 = vpop.f32.mrf.mxu0
        %v2137 = vadd.f32 0.0, %v2136
        %v2138 = vpop.f32.mrf.mxu0
        %2139 = vdwg.mxu0
        %v2140 = vmul.f32 %v1338, %v1982
        %v2141 = vmul.f32 %v1339, %v1987
        %v2142 = vmul.f32 %v1340, %v1992
        %v2143 = vmul.f32 %v1341, %v1997
        %v2144 = vmul.f32 %v1342, %v2002
        %v2145 = vmul.f32 %v1343, %v2007
        %v2146 = vmul.f32 %v1344, %v2012
        %v2147 = vmul.f32 %v1345, %v2017
        %v2148 = vmul.f32 %v1346, %v2022
        %v2149 = vmul.f32 %v1347, %v2027
        %v2150 = vmul.f32 %v1348, %v2032
        %v2151 = vmul.f32 %v1349, %v2037
        %v2152 = vmul.f32 %v1350, %v2042
        %v2153 = vmul.f32 %v1351, %v2047
        %v2154 = vmul.f32 %v1352, %v2052
        %v2155 = vmul.f32 %v1353, %v2057
        %v2156 = vmul.f32 %v1354, %v2062
        %v2157 = vmul.f32 %v1355, %v2067
        %v2158 = vmul.f32 %v1356, %v2072
        %v2159 = vmul.f32 %v1357, %v2077
        %v2160 = vmul.f32 %v1358, %v2082
        %v2161 = vmul.f32 %v1359, %v2087
        %v2162 = vmul.f32 %v1360, %v2092
        %v2163 = vmul.f32 %v1361, %v2097
        %v2164 = vmul.f32 %v1362, %v2102
        %v2165 = vmul.f32 %v1363, %v2107
        %v2166 = vmul.f32 %v1364, %v2112
        %v2167 = vmul.f32 %v1365, %v2117
        %v2168 = vmul.f32 %v1366, %v2122
        %v2169 = vmul.f32 %v1367, %v2127
        %v2170 = vmul.f32 %v1368, %v2132
        %v2171 = vmul.f32 %v1369, %v2137
        %v2172 = vld [vmem:[%s4] sm:$0x1]
        %v2174 = vlaneseq
        %v2175 = vshrl.u32 %v2174, 7
        %v2176 = vsub.s32 0, %v2175
        %v2177 = vrot.slane %v2172, %v2176
        %v2179 = vmul.f32 %v2140, %v2177
        %v2180 = vmul.f32 %v2141, %v2177
        %v2181 = vmul.f32 %v2142, %v2177
        %v2182 = vmul.f32 %v2143, %v2177
        %v2183 = vmul.f32 %v2144, %v2177
        %v2184 = vmul.f32 %v2145, %v2177
        %v2185 = vmul.f32 %v2146, %v2177
        %v2186 = vmul.f32 %v2147, %v2177
        %v2187 = vmul.f32 %v2148, %v2177
        %v2188 = vmul.f32 %v2149, %v2177
        %v2189 = vmul.f32 %v2150, %v2177
        %v2190 = vmul.f32 %v2151, %v2177
        %v2191 = vmul.f32 %v2152, %v2177
        %v2192 = vmul.f32 %v2153, %v2177
        %v2193 = vmul.f32 %v2154, %v2177
        %v2194 = vmul.f32 %v2155, %v2177
        %v2195 = vmul.f32 %v2156, %v2177
        %v2196 = vmul.f32 %v2157, %v2177
        %v2197 = vmul.f32 %v2158, %v2177
        %v2198 = vmul.f32 %v2159, %v2177
        %v2199 = vmul.f32 %v2160, %v2177
        %v2200 = vmul.f32 %v2161, %v2177
        %v2201 = vmul.f32 %v2162, %v2177
        %v2202 = vmul.f32 %v2163, %v2177
        %v2203 = vmul.f32 %v2164, %v2177
        %v2204 = vmul.f32 %v2165, %v2177
        %v2205 = vmul.f32 %v2166, %v2177
        %v2206 = vmul.f32 %v2167, %v2177
        %v2207 = vmul.f32 %v2168, %v2177
        %v2208 = vmul.f32 %v2169, %v2177
        %v2209 = vmul.f32 %v2170, %v2177
        %v2210 = vmul.f32 %v2171, %v2177
        %v2211 = vld [vmem:[%s5] sm:$0x1]
        %v2213 = vlaneseq
        %v2214 = vshrl.u32 %v2213, 7
        %v2215 = vsub.s32 0, %v2214
        %v2216 = vrot.slane %v2211, %v2215
        %v2218 = vadd.f32 %v2179, %v2216
        %v2219 = vadd.f32 %v2180, %v2216
        %v2220 = vadd.f32 %v2181, %v2216
        %v2221 = vadd.f32 %v2182, %v2216
        %v2222 = vadd.f32 %v2183, %v2216
        %v2223 = vadd.f32 %v2184, %v2216
        %v2224 = vadd.f32 %v2185, %v2216
        %v2225 = vadd.f32 %v2186, %v2216
        %v2226 = vadd.f32 %v2187, %v2216
        %v2227 = vadd.f32 %v2188, %v2216
        %v2228 = vadd.f32 %v2189, %v2216
        %v2229 = vadd.f32 %v2190, %v2216
        %v2230 = vadd.f32 %v2191, %v2216
        %v2231 = vadd.f32 %v2192, %v2216
        %v2232 = vadd.f32 %v2193, %v2216
        %v2233 = vadd.f32 %v2194, %v2216
        %v2234 = vadd.f32 %v2195, %v2216
        %v2235 = vadd.f32 %v2196, %v2216
        %v2236 = vadd.f32 %v2197, %v2216
        %v2237 = vadd.f32 %v2198, %v2216
        %v2238 = vadd.f32 %v2199, %v2216
        %v2239 = vadd.f32 %v2200, %v2216
        %v2240 = vadd.f32 %v2201, %v2216
        %v2241 = vadd.f32 %v2202, %v2216
        %v2242 = vadd.f32 %v2203, %v2216
        %v2243 = vadd.f32 %v2204, %v2216
        %v2244 = vadd.f32 %v2205, %v2216
        %v2245 = vadd.f32 %v2206, %v2216
        %v2246 = vadd.f32 %v2207, %v2216
        %v2247 = vadd.f32 %v2208, %v2216
        %v2248 = vadd.f32 %v2209, %v2216
        %v2249 = vadd.f32 %v2210, %v2216
        %2250 = vst.msk [vmem:[%s288] sm:$0xff] %vm657, %v2218
        %2251 = vst.msk [vmem:[%s288 + $0x8] sm:$0xff] %vm657, %v2219
        %2252 = vst.msk [vmem:[%s288 + $0x10] sm:$0xff] %vm657, %v2220
        %2253 = vst.msk [vmem:[%s288 + $0x18] sm:$0xff] %vm657, %v2221
        %2254 = vst.msk [vmem:[%s288 + $0x20] sm:$0xff] %vm657, %v2222
        %2255 = vst.msk [vmem:[%s288 + $0x28] sm:$0xff] %vm657, %v2223
        %2256 = vst.msk [vmem:[%s288 + $0x30] sm:$0xff] %vm657, %v2224
        %2257 = vst.msk [vmem:[%s288 + $0x38] sm:$0xff] %vm657, %v2225
        %2258 = vst.msk [vmem:[%s288 + $0x40] sm:$0xff] %vm657, %v2226
        %2259 = vst.msk [vmem:[%s288 + $0x48] sm:$0xff] %vm657, %v2227
        %2260 = vst.msk [vmem:[%s288 + $0x50] sm:$0xff] %vm657, %v2228
        %2261 = vst.msk [vmem:[%s288 + $0x58] sm:$0xff] %vm657, %v2229
        %2262 = vst.msk [vmem:[%s288 + $0x60] sm:$0xff] %vm657, %v2230
        %2263 = vst.msk [vmem:[%s288 + $0x68] sm:$0xff] %vm657, %v2231
        %2264 = vst.msk [vmem:[%s288 + $0x70] sm:$0xff] %vm657, %v2232
        %2265 = vst.msk [vmem:[%s288 + $0x78] sm:$0xff] %vm657, %v2233
        %2266 = vst.msk [vmem:[%s288 + $0x80] sm:$0xff] %vm657, %v2234
        %2267 = vst.msk [vmem:[%s288 + $0x88] sm:$0xff] %vm657, %v2235
        %2268 = vst.msk [vmem:[%s288 + $0x90] sm:$0xff] %vm657, %v2236
        %2269 = vst.msk [vmem:[%s288 + $0x98] sm:$0xff] %vm657, %v2237
        %2270 = vst.msk [vmem:[%s288 + $0xa0] sm:$0xff] %vm657, %v2238
        %2271 = vst.msk [vmem:[%s288 + $0xa8] sm:$0xff] %vm657, %v2239
        %2272 = vst.msk [vmem:[%s288 + $0xb0] sm:$0xff] %vm657, %v2240
        %2273 = vst.msk [vmem:[%s288 + $0xb8] sm:$0xff] %vm657, %v2241
        %2274 = vst.msk [vmem:[%s288 + $0xc0] sm:$0xff] %vm657, %v2242
        %2275 = vst.msk [vmem:[%s288 + $0xc8] sm:$0xff] %vm657, %v2243
        %2276 = vst.msk [vmem:[%s288 + $0xd0] sm:$0xff] %vm657, %v2244
        %2277 = vst.msk [vmem:[%s288 + $0xd8] sm:$0xff] %vm657, %v2245
        %2278 = vst.msk [vmem:[%s288 + $0xe0] sm:$0xff] %vm657, %v2246
        %2279 = vst.msk [vmem:[%s288 + $0xe8] sm:$0xff] %vm657, %v2247
        %2280 = vst.msk [vmem:[%s288 + $0xf0] sm:$0xff] %vm657, %v2248
        %2281 = vst.msk [vmem:[%s288 + $0xf8] sm:$0xff] %vm657, %v2249
        %s2282 = sand.u32 %s178, 1
        %s2283 = scalar_lea.sflag [#allocation4], %s2282
        %s2284 = sand.u32 %s178, 1
        %s2285 = smul.addr %s2284, 256
        %s2286 = scalar_lea.vmem [#allocation5], %s2285
        // Predicated region
        $region49: #{tpu_custom_call.1} parent=43 // pred_check
          %p2287 = pneg %p188
        $region50: #{tpu_custom_call.1} parent=43 // pred_check_branch
          %2289 = sbr.rel (%p2287) target = $region52
        $region51: #{tpu_custom_call.1} parent=43 // pred_region
          %s2290 = smul.u32 16, %s28
          %s2292 = ssub.s32 4096, 4096
          %2293 = vsyncadd %s2283, %s2292
          %s2294 = smul.addr %s2290, 2
          %s2295 = smul.addr %s27, 32
          %s2296 = sadd.s32 %s2294, %s2295
          %s2297 = smul.addr %s2296, 128
          %s2298 = scalar_lea.hbm %s6, %s2297
          %s2299 = sshll.u32 %s2286, 4
          %s2300 = int_to_ptr.vmem [resolvable:$true] %s2299
          %2305 = dma.vmem_to_hbm [thread:$0]  %s2300, 4096, %s2298, %s2283, 128, 128, 8
        $region52: #{tpu_custom_call.1} parent=43 // pred_fallthru
          _
      $region44: #{tpu_custom_call.1} parent=5 // pred_fallthru
        _
      %p2306 = scmp.le.s32.totalorder 2, %s18
      // Predicated region
      $region53: #{tpu_custom_call.1} parent=5 // pred_check
        %p2307 = pneg %p2306
      $region54: #{tpu_custom_call.1} parent=5 // pred_check_branch
        %2309 = sbr.rel (%p2307) target = $region56
      $region55: #{tpu_custom_call.1} parent=5 // pred_region
        %s2310 = ssub.s32 %s18, 2
        // Predicated region
        $region57: #{tpu_custom_call.1} parent=55 // pred_check
          %p2311 = pneg %p194
        $region58: #{tpu_custom_call.1} parent=55 // pred_check_branch
          %2313 = sbr.rel (%p2311) target = $region60
        $region59: #{tpu_custom_call.1} parent=55 // pred_region
          %s2314 = sand.u32 %s179, 1
          %s2315 = scalar_lea.sflag [#allocation4], %s2314
          %s2316 = sand.u32 %s179, 1
          %s2317 = smul.addr %s2316, 256
          %s2318 = scalar_lea.vmem [#allocation5], %s2317
          %2319 = dma.done %s2315, 4096
        $region60: #{tpu_custom_call.1} parent=55 // pred_fallthru
          _
      $region56: #{tpu_custom_call.1} parent=5 // pred_fallthru
        _
    $region6: #{tpu_custom_call.1} parent=1 // loop_footer
      %s22 = sadd.s32 1, %s18
    $region7: #{tpu_custom_call.1} parent=1 // loop_footer_branch
      %17 = sbr.rel target = $region3
    $region8: #{tpu_custom_call.1} parent=1 // loop_exit
      _
    %2320 = vsyncpa [#allocation3], 1
    %s2321 = scalar_lea.sflag [#allocation3], 1
    %2322 = vsyncpa %s2321, 1
    %2323 = vsyncpa [#allocation4], 1
    %s2324 = scalar_lea.sflag [#allocation4], 1
    %2325 = vsyncpa %s2324, 1

</llo_original>
